<compile_context>
chip_gen: v6e
topology: v6e:2x2x1
jax: 0.10.0
libtpu: 0.0.40
codegen_flags: <defaults>
</compile_context>

<pallas_src>
import functools
import math

import jax
import jax.numpy as jnp
from jax import lax
from jax.experimental import pallas as pl
from jax.experimental.pallas import tpu as pltpu


# ----------------------------------------------------------------------------
# Fused kernel: QKV proj + context add + attention + W_o + residual + LayerNorm
# ----------------------------------------------------------------------------
def _make_fused_kernel(*, n_heads, d_model, seq, batch_tile, scale,
                       has_context, mask_mode):
    dk = d_model // n_heads
    bf16 = jnp.bfloat16

    def kernel(*refs):
        it = iter(refs)
        q_ref = next(it)                  # (bt, L, D) f32  (also the residual)
        k_ref = next(it)                  # (bt, L, D) f32
        v_ref = next(it)                  # (bt, L, D) f32
        mc_ref = next(it) if has_context else None          # (bt, 1, D) f32
        mask_ref = next(it) if mask_mode != "none" else None
        wq_ref, bq_ref = next(it), next(it)                  # (D, D) bf16 / (1, D) f32
        wk_ref, bk_ref = next(it), next(it)
        wv_ref, bv_ref = next(it), next(it)
        if has_context:
            wc_ref, bc_ref = next(it), next(it)
        wo_ref, bo_ref = next(it), next(it)
        g_ref, b_ref = next(it), next(it)                    # LayerNorm gamma/beta
        o_ref = next(it)                  # (bt, L, D) f32 output
        ctx_scr = next(it)                # VMEM (L, D) f32 scratch (concat-free heads)

        if mask_mode == "shared":
            masked_shared = mask_ref[...] == 0.0             # computed once

        for b in range(batch_tile):       # static unroll over the batch tile
            q_in = q_ref[b]               # (L, D) f32 residual

            # Q/K/V projections (bf16 MXU, f32 accumulate); scale folded into Q.
            qp = (jnp.dot(q_in.astype(bf16), wq_ref[...],
                          preferred_element_type=jnp.float32) + bq_ref[...]) * scale
            kp = jnp.dot(k_ref[b].astype(bf16), wk_ref[...],
                         preferred_element_type=jnp.float32) + bk_ref[...]
            vp = jnp.dot(v_ref[b].astype(bf16), wv_ref[...],
                         preferred_element_type=jnp.float32) + bv_ref[...]

            if has_context:
                ctx_p = jnp.dot(mc_ref[b].astype(bf16), wc_ref[...],
                                preferred_element_type=jnp.float32) + bc_ref[...]  # (1, D)
                kp = kp + ctx_p            # broadcast over the sequence axis

            if mask_mode == "per_batch":
                masked = mask_ref[b] == 0.0
            elif mask_mode == "shared":
                masked = masked_shared

            qb = qp.astype(bf16)
            kb = kp.astype(bf16)
            vb = vp.astype(bf16)

            for h in range(n_heads):       # static unroll; heads kept in vregs
                sl = slice(h * dk, (h + 1) * dk)
                s = lax.dot_general(qb[:, sl], kb[:, sl], (((1,), (1,)), ((), ())),
                                    preferred_element_type=jnp.float32)      # (L, L)
                if mask_mode != "none":
                    s = jnp.where(masked, -1e9, s)
                s = s - jnp.max(s, axis=-1, keepdims=True)
                e = jnp.exp(s)
                p = e * pl.reciprocal(jnp.sum(e, axis=-1, keepdims=True), approx=True)
                # Write this head's context directly into its lane slice of the
                # (L, D) scratch -- no jnp.concatenate relayout.
                ctx_scr[:, sl] = jnp.dot(p.astype(bf16), vb[:, sl],
                                         preferred_element_type=jnp.float32)

            out = jnp.dot(ctx_scr[...].astype(bf16), wo_ref[...],
                          preferred_element_type=jnp.float32) + bo_ref[...]
            y = out + q_in                                    # residual (f32)
            mu = jnp.mean(y, axis=-1, keepdims=True)
            var = jnp.mean((y - mu) ** 2, axis=-1, keepdims=True)
            o_ref[b] = (y - mu) * lax.rsqrt(var + 1e-5) * g_ref[...] + b_ref[...]

    return kernel


# ----------------------------------------------------------------------------
# Public forward
# ----------------------------------------------------------------------------
def mha_with_context(kparams, query, key, value, mask=None, market_context=None,
                     *, n_heads, batch_tile=1):
    bsz, seq, d_model = query.shape
    assert d_model % n_heads == 0
    assert bsz % batch_tile == 0
    scale = 1.0 / math.sqrt(d_model // n_heads)
    f32 = jnp.float32
    has_context = market_context is not None

    if mask is None:
        mask_mode = "none"
    elif mask.ndim == 2 or (mask.ndim == 3 and mask.shape[0] == 1):
        mask_mode = "shared"          # one resident (L, L) block, DMA'd once
    else:
        mask_mode = "per_batch"

    grid = (bsz // batch_tile,)
    row3 = pl.BlockSpec((batch_tile, seq, d_model), lambda i: (i, 0, 0))

    def const(shape):
        return pl.BlockSpec(shape, lambda i: (0,) * len(shape))

    inputs = [query.astype(f32), key.astype(f32), value.astype(f32)]
    in_specs = [row3, row3, row3]
    if has_context:
        inputs.append(market_context.reshape(bsz, 1, d_model).astype(f32))
        in_specs.append(pl.BlockSpec((batch_tile, 1, d_model), lambda i: (i, 0, 0)))
    if mask_mode == "shared":
        inputs.append(mask.reshape(seq, seq).astype(f32))
        in_specs.append(const((seq, seq)))
    elif mask_mode == "per_batch":
        inputs.append(mask.astype(f32))
        in_specs.append(pl.BlockSpec((batch_tile, seq, seq), lambda i: (i, 0, 0)))

    wspec = const((d_model, d_model))
    bspec = const((1, d_model))
    inputs += [kparams["wq"], kparams["bq"], kparams["wk"], kparams["bk"],
               kparams["wv"], kparams["bv"]]
    in_specs += [wspec, bspec, wspec, bspec, wspec, bspec]
    if has_context:
        inputs += [kparams["wc"], kparams["bc"]]
        in_specs += [wspec, bspec]
    inputs += [kparams["wo"], kparams["bo"], kparams["ln_g"], kparams["ln_b"]]
    in_specs += [wspec, bspec, bspec, bspec]

    kernel = _make_fused_kernel(n_heads=n_heads, d_model=d_model, seq=seq,
                                batch_tile=batch_tile, scale=scale,
                                has_context=has_context, mask_mode=mask_mode)

    out = pl.pallas_call(
        kernel,
        out_shape=jax.ShapeDtypeStruct((bsz, seq, d_model), f32),
        grid=grid,
        in_specs=in_specs,
        out_specs=row3,
        scratch_shapes=[pltpu.VMEM((seq, d_model), f32)],
        compiler_params=pltpu.CompilerParams(dimension_semantics=("parallel",)),
    )(*inputs)
    return out


# ----------------------------------------------------------------------------
# Parameters (PyTorch nn.Linear / nn.LayerNorm defaults) and f32 reference
# ----------------------------------------------------------------------------
def init_params(key, d_model):
    ks = jax.random.split(key, 5)

    def linear_p(k, in_f, out_f):
        bound = 1.0 / math.sqrt(in_f)
        k1, k2 = jax.random.split(k)
        w = jax.random.uniform(k1, (in_f, out_f), jnp.float32, -bound, bound)  # stored as W^T
        b = jax.random.uniform(k2, (1, out_f), jnp.float32, -bound, bound)
        return w, b

    p = {}
    p["wq"], p["bq"] = linear_p(ks[0], d_model, d_model)
    p["wk"], p["bk"] = linear_p(ks[1], d_model, d_model)
    p["wv"], p["bv"] = linear_p(ks[2], d_model, d_model)
    p["wo"], p["bo"] = linear_p(ks[3], d_model, d_model)
    p["wc"], p["bc"] = linear_p(ks[4], d_model, d_model)     # context_projection
    p["ln_g"] = jnp.ones((1, d_model), jnp.float32)
    p["ln_b"] = jnp.zeros((1, d_model), jnp.float32)
    return p


def pack_params(p):
    """Pre-cast matmul weights to bf16 ONCE, outside the jitted forward."""
    bf = jnp.bfloat16
    kp = dict(p)
    for w in ("wq", "wk", "wv", "wo", "wc"):
        kp[w] = p[w].astype(bf)
    return kp


def reference(params, query, key, value, mask, market_context, n_heads):
    bsz, seq, d_model = query.shape
    dk = d_model // n_heads
    q = query @ params["wq"] + params["bq"]
    k = key @ params["wk"] + params["bk"]
    v = value @ params["wv"] + params["bv"]
    if market_context is not None:
        ctx = market_context @ params["wc"] + params["bc"]     # (B, D)
        k = k + ctx[:, None, :]
    qh = q.reshape(bsz, seq, n_heads, dk).transpose(0, 2, 1, 3)
    kh = k.reshape(bsz, seq, n_heads, dk).transpose(0, 2, 1, 3)
    vh = v.reshape(bsz, seq, n_heads, dk).transpose(0, 2, 1, 3)
    s = jnp.einsum("bhqd,bhkd->bhqk", qh, kh) / math.sqrt(dk)
    if mask is not None:
        m = mask if mask.ndim == 3 else mask[None]
        s = jnp.where(m[:, None, :, :] == 0, -1e9, s)
    p_attn = jax.nn.softmax(s, axis=-1)
    ctxh = jnp.einsum("bhqk,bhkd->bhqd", p_attn, vh)
    ctx2 = ctxh.transpose(0, 2, 1, 3).reshape(bsz, seq, d_model)
    out = ctx2 @ params["wo"] + params["bo"]
    y = out + query
    mu = jnp.mean(y, axis=-1, keepdims=True)
    var = jnp.mean((y - mu) ** 2, axis=-1, keepdims=True)
    return (y - mu) * lax.rsqrt(var + 1e-5) * params["ln_g"] + params["ln_b"]


# ----------------------------------------------------------------------------
if __name__ == "__main__":
    BATCH, SEQ, D_MODEL, N_HEADS = 2, 32, 32, 4

    root = jax.random.PRNGKey(0)
    kp, kq, kk, kv, kc = jax.random.split(root, 5)
    params = init_params(kp, D_MODEL)
    kparams = pack_params(params)                     # bf16 weights, cast once
    query = jax.random.normal(kq, (BATCH, SEQ, D_MODEL), jnp.float32)
    key_in = jax.random.normal(kk, (BATCH, SEQ, D_MODEL), jnp.float32)
    value = jax.random.normal(kv, (BATCH, SEQ, D_MODEL), jnp.float32)
    market_context = jax.random.normal(kc, (BATCH, D_MODEL), jnp.float32)
    causal_mask = jnp.tril(jnp.ones((SEQ, SEQ), jnp.float32))   # shared -> resident block

    fwd = jax.jit(functools.partial(mha_with_context, n_heads=N_HEADS))
    out = fwd(kparams, query, key_in, value, causal_mask, market_context)
    jax.block_until_ready(out)

    ref = reference(params, query, key_in, value, causal_mask, market_context, N_HEADS)
    assert out.shape == (BATCH, SEQ, D_MODEL)
    assert bool(jnp.all(jnp.isfinite(out)))
    max_err = float(jnp.max(jnp.abs(out - ref)))
    assert max_err < 0.1, f"max abs err {max_err}"   # bf16 matmuls + approx reciprocal
    print("KERNEL_OK")
</pallas_src>

<mosaic_0001>
module attributes {stable_mosaic.version = 11 : i64} {
  func.func @kernel(%arg0: i32, %arg1: memref<1x32x32xf32, #tpu.memory_space<vmem>>, %arg2: memref<1x32x32xf32, #tpu.memory_space<vmem>>, %arg3: memref<1x32x32xf32, #tpu.memory_space<vmem>>, %arg4: memref<1x1x32xf32, #tpu.memory_space<vmem>>, %arg5: memref<32x32xf32, #tpu.memory_space<vmem>>, %arg6: memref<32x32xbf16, #tpu.memory_space<vmem>>, %arg7: memref<1x32xf32, #tpu.memory_space<vmem>>, %arg8: memref<32x32xbf16, #tpu.memory_space<vmem>>, %arg9: memref<1x32xf32, #tpu.memory_space<vmem>>, %arg10: memref<32x32xbf16, #tpu.memory_space<vmem>>, %arg11: memref<1x32xf32, #tpu.memory_space<vmem>>, %arg12: memref<32x32xbf16, #tpu.memory_space<vmem>>, %arg13: memref<1x32xf32, #tpu.memory_space<vmem>>, %arg14: memref<32x32xbf16, #tpu.memory_space<vmem>>, %arg15: memref<1x32xf32, #tpu.memory_space<vmem>>, %arg16: memref<1x32xf32, #tpu.memory_space<vmem>>, %arg17: memref<1x32xf32, #tpu.memory_space<vmem>>, %arg18: memref<1x32x32xf32, #tpu.memory_space<vmem>>, %arg19: memref<32x32xf32, #tpu.memory_space<vmem>>) attributes {dimension_semantics = [#tpu.dimension_semantics<parallel>], iteration_bounds = array<i64: 2>, scalar_prefetch = 0 : i64, scratch_operands = 1 : i64, tpu.core_type = #tpu.core_type<tc>, window_params = [{transform_indices = @transform_0, window_bounds = array<i64: 1, 32, 32>}, {transform_indices = @transform_1, window_bounds = array<i64: 1, 32, 32>}, {transform_indices = @transform_2, window_bounds = array<i64: 1, 32, 32>}, {transform_indices = @transform_3, window_bounds = array<i64: 1, 1, 32>}, {pipeline_mode = #tpu.pipeline_mode<synchronous>, transform_indices = @transform_4, window_bounds = array<i64: 32, 32>}, {pipeline_mode = #tpu.pipeline_mode<synchronous>, transform_indices = @transform_5, window_bounds = array<i64: 32, 32>}, {pipeline_mode = #tpu.pipeline_mode<synchronous>, transform_indices = @transform_6, window_bounds = array<i64: 1, 32>}, {pipeline_mode = #tpu.pipeline_mode<synchronous>, transform_indices = @transform_7, window_bounds = array<i64: 32, 32>}, {pipeline_mode = #tpu.pipeline_mode<synchronous>, transform_indices = @transform_8, window_bounds = array<i64: 1, 32>}, {pipeline_mode = #tpu.pipeline_mode<synchronous>, transform_indices = @transform_9, window_bounds = array<i64: 32, 32>}, {pipeline_mode = #tpu.pipeline_mode<synchronous>, transform_indices = @transform_10, window_bounds = array<i64: 1, 32>}, {pipeline_mode = #tpu.pipeline_mode<synchronous>, transform_indices = @transform_11, window_bounds = array<i64: 32, 32>}, {pipeline_mode = #tpu.pipeline_mode<synchronous>, transform_indices = @transform_12, window_bounds = array<i64: 1, 32>}, {pipeline_mode = #tpu.pipeline_mode<synchronous>, transform_indices = @transform_13, window_bounds = array<i64: 32, 32>}, {pipeline_mode = #tpu.pipeline_mode<synchronous>, transform_indices = @transform_14, window_bounds = array<i64: 1, 32>}, {pipeline_mode = #tpu.pipeline_mode<synchronous>, transform_indices = @transform_15, window_bounds = array<i64: 1, 32>}, {pipeline_mode = #tpu.pipeline_mode<synchronous>, transform_indices = @transform_16, window_bounds = array<i64: 1, 32>}, {transform_indices = @transform_17, window_bounds = array<i64: 1, 32, 32>}]} {
    %c0 = arith.constant 0 : index
    %c0_0 = arith.constant 0 : index
    %0 = vector.load %arg5[%c0, %c0_0] : memref<32x32xf32, #tpu.memory_space<vmem>>, vector<32x32xf32>
    %cst = arith.constant 0.000000e+00 : f32
    %1 = vector.broadcast %cst : f32 to vector<32x32xf32>
    %2 = arith.cmpf oeq, %0, %1 : vector<32x32xf32>
    %c0_1 = arith.constant 0 : index
    %c0_2 = arith.constant 0 : index
    %c0_3 = arith.constant 0 : index
    %3 = vector.load %arg1[%c0_1, %c0_2, %c0_3] : memref<1x32x32xf32, #tpu.memory_space<vmem>>, vector<1x32x32xf32>
    %4 = vector.shape_cast %3 : vector<1x32x32xf32> to vector<32x32xf32>
    %5 = arith.truncf %4 : vector<32x32xf32> to vector<32x32xbf16>
    %c0_4 = arith.constant 0 : index
    %c0_5 = arith.constant 0 : index
    %6 = vector.load %arg6[%c0_4, %c0_5] : memref<32x32xbf16, #tpu.memory_space<vmem>>, vector<32x32xbf16>
    %cst_6 = arith.constant dense<0.000000e+00> : vector<32x32xf32>
    %7 = tpu.matmul %5, %6, %cst_6 {dimension_numbers = #tpu.dot_dimension_numbers<[1], [0], [0], [1], [0, 0, 1, 1], [], []>} : vector<32x32xbf16>, vector<32x32xbf16>, vector<32x32xf32> -> vector<32x32xf32>
    %c0_7 = arith.constant 0 : index
    %c0_8 = arith.constant 0 : index
    %8 = vector.load %arg7[%c0_7, %c0_8] : memref<1x32xf32, #tpu.memory_space<vmem>>, vector<1x32xf32>
    %9 = vector.broadcast %8 : vector<1x32xf32> to vector<32x32xf32>
    %10 = arith.addf %7, %9 : vector<32x32xf32>
    %cst_9 = arith.constant 0.353553385 : f32
    %11 = vector.broadcast %cst_9 : f32 to vector<32x32xf32>
    %12 = arith.mulf %10, %11 : vector<32x32xf32>
    %c0_10 = arith.constant 0 : index
    %c0_11 = arith.constant 0 : index
    %c0_12 = arith.constant 0 : index
    %13 = vector.load %arg2[%c0_10, %c0_11, %c0_12] : memref<1x32x32xf32, #tpu.memory_space<vmem>>, vector<1x32x32xf32>
    %14 = vector.shape_cast %13 : vector<1x32x32xf32> to vector<32x32xf32>
    %15 = arith.truncf %14 : vector<32x32xf32> to vector<32x32xbf16>
    %c0_13 = arith.constant 0 : index
    %c0_14 = arith.constant 0 : index
    %16 = vector.load %arg8[%c0_13, %c0_14] : memref<32x32xbf16, #tpu.memory_space<vmem>>, vector<32x32xbf16>
    %cst_15 = arith.constant dense<0.000000e+00> : vector<32x32xf32>
    %17 = tpu.matmul %15, %16, %cst_15 {dimension_numbers = #tpu.dot_dimension_numbers<[1], [0], [0], [1], [0, 0, 1, 1], [], []>} : vector<32x32xbf16>, vector<32x32xbf16>, vector<32x32xf32> -> vector<32x32xf32>
    %c0_16 = arith.constant 0 : index
    %c0_17 = arith.constant 0 : index
    %18 = vector.load %arg9[%c0_16, %c0_17] : memref<1x32xf32, #tpu.memory_space<vmem>>, vector<1x32xf32>
    %19 = vector.broadcast %18 : vector<1x32xf32> to vector<32x32xf32>
    %20 = arith.addf %17, %19 : vector<32x32xf32>
    %c0_18 = arith.constant 0 : index
    %c0_19 = arith.constant 0 : index
    %c0_20 = arith.constant 0 : index
    %21 = vector.load %arg3[%c0_18, %c0_19, %c0_20] : memref<1x32x32xf32, #tpu.memory_space<vmem>>, vector<1x32x32xf32>
    %22 = vector.shape_cast %21 : vector<1x32x32xf32> to vector<32x32xf32>
    %23 = arith.truncf %22 : vector<32x32xf32> to vector<32x32xbf16>
    %c0_21 = arith.constant 0 : index
    %c0_22 = arith.constant 0 : index
    %24 = vector.load %arg10[%c0_21, %c0_22] : memref<32x32xbf16, #tpu.memory_space<vmem>>, vector<32x32xbf16>
    %cst_23 = arith.constant dense<0.000000e+00> : vector<32x32xf32>
    %25 = tpu.matmul %23, %24, %cst_23 {dimension_numbers = #tpu.dot_dimension_numbers<[1], [0], [0], [1], [0, 0, 1, 1], [], []>} : vector<32x32xbf16>, vector<32x32xbf16>, vector<32x32xf32> -> vector<32x32xf32>
    %c0_24 = arith.constant 0 : index
    %c0_25 = arith.constant 0 : index
    %26 = vector.load %arg11[%c0_24, %c0_25] : memref<1x32xf32, #tpu.memory_space<vmem>>, vector<1x32xf32>
    %27 = vector.broadcast %26 : vector<1x32xf32> to vector<32x32xf32>
    %28 = arith.addf %25, %27 : vector<32x32xf32>
    %c0_26 = arith.constant 0 : index
    %c0_27 = arith.constant 0 : index
    %c0_28 = arith.constant 0 : index
    %29 = vector.load %arg4[%c0_26, %c0_27, %c0_28] : memref<1x1x32xf32, #tpu.memory_space<vmem>>, vector<1x1x32xf32>
    %30 = vector.shape_cast %29 : vector<1x1x32xf32> to vector<1x32xf32>
    %31 = arith.truncf %30 : vector<1x32xf32> to vector<1x32xbf16>
    %c0_29 = arith.constant 0 : index
    %c0_30 = arith.constant 0 : index
    %32 = vector.load %arg12[%c0_29, %c0_30] : memref<32x32xbf16, #tpu.memory_space<vmem>>, vector<32x32xbf16>
    %cst_31 = arith.constant dense<0.000000e+00> : vector<1x32xf32>
    %33 = tpu.matmul %31, %32, %cst_31 {dimension_numbers = #tpu.dot_dimension_numbers<[1], [0], [0], [1], [0, 0, 1, 1], [], []>} : vector<1x32xbf16>, vector<32x32xbf16>, vector<1x32xf32> -> vector<1x32xf32>
    %c0_32 = arith.constant 0 : index
    %c0_33 = arith.constant 0 : index
    %34 = vector.load %arg13[%c0_32, %c0_33] : memref<1x32xf32, #tpu.memory_space<vmem>>, vector<1x32xf32>
    %35 = arith.addf %33, %34 : vector<1x32xf32>
    %36 = vector.broadcast %35 : vector<1x32xf32> to vector<32x32xf32>
    %37 = arith.addf %20, %36 : vector<32x32xf32>
    %38 = arith.truncf %12 : vector<32x32xf32> to vector<32x32xbf16>
    %39 = arith.truncf %37 : vector<32x32xf32> to vector<32x32xbf16>
    %40 = arith.truncf %28 : vector<32x32xf32> to vector<32x32xbf16>
    %41 = vector.extract_strided_slice %38 {offsets = [0, 0], sizes = [32, 8], strides = [1, 1]} : vector<32x32xbf16> to vector<32x8xbf16>
    %42 = vector.extract_strided_slice %39 {offsets = [0, 0], sizes = [32, 8], strides = [1, 1]} : vector<32x32xbf16> to vector<32x8xbf16>
    %cst_34 = arith.constant dense<0.000000e+00> : vector<32x32xf32>
    %43 = tpu.matmul %41, %42, %cst_34 {dimension_numbers = #tpu.dot_dimension_numbers<[1], [1], [0], [0], [0, 0, 1, 0], [], []>} : vector<32x8xbf16>, vector<32x8xbf16>, vector<32x32xf32> -> vector<32x32xf32>
    %cst_35 = arith.constant -1.000000e+09 : f32
    %44 = vector.broadcast %cst_35 : f32 to vector<32x32xf32>
    %45 = arith.select %2, %44, %43 : vector<32x32xi1>, vector<32x32xf32>
    %cst_36 = arith.constant dense<0xFF800000> : vector<32xf32>
    %46 = vector.multi_reduction <maximumf>, %45, %cst_36 [1] : vector<32x32xf32> to vector<32xf32>
    %47 = vector.shape_cast %46 : vector<32xf32> to vector<32x1xf32>
    %48 = vector.broadcast %47 : vector<32x1xf32> to vector<32x32xf32>
    %49 = arith.subf %45, %48 : vector<32x32xf32>
    %50 = math.exp %49 : vector<32x32xf32>
    %cst_37 = arith.constant dense<0.000000e+00> : vector<32xf32>
    %51 = vector.multi_reduction <add>, %50, %cst_37 [1] : vector<32x32xf32> to vector<32xf32>
    %52 = vector.shape_cast %51 : vector<32xf32> to vector<32x1xf32>
    %53 = tpu.reciprocal %52 {approx = true} : vector<32x1xf32> -> vector<32x1xf32>
    %54 = vector.broadcast %53 : vector<32x1xf32> to vector<32x32xf32>
    %55 = arith.mulf %50, %54 : vector<32x32xf32>
    %56 = arith.truncf %55 : vector<32x32xf32> to vector<32x32xbf16>
    %57 = vector.extract_strided_slice %40 {offsets = [0, 0], sizes = [32, 8], strides = [1, 1]} : vector<32x32xbf16> to vector<32x8xbf16>
    %cst_38 = arith.constant dense<0.000000e+00> : vector<32x8xf32>
    %58 = tpu.matmul %56, %57, %cst_38 {dimension_numbers = #tpu.dot_dimension_numbers<[1], [0], [0], [1], [0, 0, 1, 1], [], []>} : vector<32x32xbf16>, vector<32x8xbf16>, vector<32x8xf32> -> vector<32x8xf32>
    %c0_39 = arith.constant 0 : index
    %c0_40 = arith.constant 0 : index
    %59 = vector.load %arg19[%c0_39, %c0_40] : memref<32x32xf32, #tpu.memory_space<vmem>>, vector<32x8xf32>
    tpu.vector_store %arg19[%c0_39, %c0_40], %58 {strides = array<i32>} : memref<32x32xf32, #tpu.memory_space<vmem>>, vector<32x8xf32>,
    %60 = vector.extract_strided_slice %38 {offsets = [0, 8], sizes = [32, 8], strides = [1, 1]} : vector<32x32xbf16> to vector<32x8xbf16>
    %61 = vector.extract_strided_slice %39 {offsets = [0, 8], sizes = [32, 8], strides = [1, 1]} : vector<32x32xbf16> to vector<32x8xbf16>
    %cst_41 = arith.constant dense<0.000000e+00> : vector<32x32xf32>
    %62 = tpu.matmul %60, %61, %cst_41 {dimension_numbers = #tpu.dot_dimension_numbers<[1], [1], [0], [0], [0, 0, 1, 0], [], []>} : vector<32x8xbf16>, vector<32x8xbf16>, vector<32x32xf32> -> vector<32x32xf32>
    %cst_42 = arith.constant -1.000000e+09 : f32
    %63 = vector.broadcast %cst_42 : f32 to vector<32x32xf32>
    %64 = arith.select %2, %63, %62 : vector<32x32xi1>, vector<32x32xf32>
    %cst_43 = arith.constant dense<0xFF800000> : vector<32xf32>
    %65 = vector.multi_reduction <maximumf>, %64, %cst_43 [1] : vector<32x32xf32> to vector<32xf32>
    %66 = vector.shape_cast %65 : vector<32xf32> to vector<32x1xf32>
    %67 = vector.broadcast %66 : vector<32x1xf32> to vector<32x32xf32>
    %68 = arith.subf %64, %67 : vector<32x32xf32>
    %69 = math.exp %68 : vector<32x32xf32>
    %cst_44 = arith.constant dense<0.000000e+00> : vector<32xf32>
    %70 = vector.multi_reduction <add>, %69, %cst_44 [1] : vector<32x32xf32> to vector<32xf32>
    %71 = vector.shape_cast %70 : vector<32xf32> to vector<32x1xf32>
    %72 = tpu.reciprocal %71 {approx = true} : vector<32x1xf32> -> vector<32x1xf32>
    %73 = vector.broadcast %72 : vector<32x1xf32> to vector<32x32xf32>
    %74 = arith.mulf %69, %73 : vector<32x32xf32>
    %75 = arith.truncf %74 : vector<32x32xf32> to vector<32x32xbf16>
    %76 = vector.extract_strided_slice %40 {offsets = [0, 8], sizes = [32, 8], strides = [1, 1]} : vector<32x32xbf16> to vector<32x8xbf16>
    %cst_45 = arith.constant dense<0.000000e+00> : vector<32x8xf32>
    %77 = tpu.matmul %75, %76, %cst_45 {dimension_numbers = #tpu.dot_dimension_numbers<[1], [0], [0], [1], [0, 0, 1, 1], [], []>} : vector<32x32xbf16>, vector<32x8xbf16>, vector<32x8xf32> -> vector<32x8xf32>
    %c0_46 = arith.constant 0 : index
    %c8 = arith.constant 8 : index
    %78 = vector.load %arg19[%c0_46, %c8] : memref<32x32xf32, #tpu.memory_space<vmem>>, vector<32x8xf32>
    tpu.vector_store %arg19[%c0_46, %c8], %77 {strides = array<i32>} : memref<32x32xf32, #tpu.memory_space<vmem>>, vector<32x8xf32>,
    %79 = vector.extract_strided_slice %38 {offsets = [0, 16], sizes = [32, 8], strides = [1, 1]} : vector<32x32xbf16> to vector<32x8xbf16>
    %80 = vector.extract_strided_slice %39 {offsets = [0, 16], sizes = [32, 8], strides = [1, 1]} : vector<32x32xbf16> to vector<32x8xbf16>
    %cst_47 = arith.constant dense<0.000000e+00> : vector<32x32xf32>
    %81 = tpu.matmul %79, %80, %cst_47 {dimension_numbers = #tpu.dot_dimension_numbers<[1], [1], [0], [0], [0, 0, 1, 0], [], []>} : vector<32x8xbf16>, vector<32x8xbf16>, vector<32x32xf32> -> vector<32x32xf32>
    %cst_48 = arith.constant -1.000000e+09 : f32
    %82 = vector.broadcast %cst_48 : f32 to vector<32x32xf32>
    %83 = arith.select %2, %82, %81 : vector<32x32xi1>, vector<32x32xf32>
    %cst_49 = arith.constant dense<0xFF800000> : vector<32xf32>
    %84 = vector.multi_reduction <maximumf>, %83, %cst_49 [1] : vector<32x32xf32> to vector<32xf32>
    %85 = vector.shape_cast %84 : vector<32xf32> to vector<32x1xf32>
    %86 = vector.broadcast %85 : vector<32x1xf32> to vector<32x32xf32>
    %87 = arith.subf %83, %86 : vector<32x32xf32>
    %88 = math.exp %87 : vector<32x32xf32>
    %cst_50 = arith.constant dense<0.000000e+00> : vector<32xf32>
    %89 = vector.multi_reduction <add>, %88, %cst_50 [1] : vector<32x32xf32> to vector<32xf32>
    %90 = vector.shape_cast %89 : vector<32xf32> to vector<32x1xf32>
    %91 = tpu.reciprocal %90 {approx = true} : vector<32x1xf32> -> vector<32x1xf32>
    %92 = vector.broadcast %91 : vector<32x1xf32> to vector<32x32xf32>
    %93 = arith.mulf %88, %92 : vector<32x32xf32>
    %94 = arith.truncf %93 : vector<32x32xf32> to vector<32x32xbf16>
    %95 = vector.extract_strided_slice %40 {offsets = [0, 16], sizes = [32, 8], strides = [1, 1]} : vector<32x32xbf16> to vector<32x8xbf16>
    %cst_51 = arith.constant dense<0.000000e+00> : vector<32x8xf32>
    %96 = tpu.matmul %94, %95, %cst_51 {dimension_numbers = #tpu.dot_dimension_numbers<[1], [0], [0], [1], [0, 0, 1, 1], [], []>} : vector<32x32xbf16>, vector<32x8xbf16>, vector<32x8xf32> -> vector<32x8xf32>
    %c0_52 = arith.constant 0 : index
    %c16 = arith.constant 16 : index
    %97 = vector.load %arg19[%c0_52, %c16] : memref<32x32xf32, #tpu.memory_space<vmem>>, vector<32x8xf32>
    tpu.vector_store %arg19[%c0_52, %c16], %96 {strides = array<i32>} : memref<32x32xf32, #tpu.memory_space<vmem>>, vector<32x8xf32>,
    %98 = vector.extract_strided_slice %38 {offsets = [0, 24], sizes = [32, 8], strides = [1, 1]} : vector<32x32xbf16> to vector<32x8xbf16>
    %99 = vector.extract_strided_slice %39 {offsets = [0, 24], sizes = [32, 8], strides = [1, 1]} : vector<32x32xbf16> to vector<32x8xbf16>
    %cst_53 = arith.constant dense<0.000000e+00> : vector<32x32xf32>
    %100 = tpu.matmul %98, %99, %cst_53 {dimension_numbers = #tpu.dot_dimension_numbers<[1], [1], [0], [0], [0, 0, 1, 0], [], []>} : vector<32x8xbf16>, vector<32x8xbf16>, vector<32x32xf32> -> vector<32x32xf32>
    %cst_54 = arith.constant -1.000000e+09 : f32
    %101 = vector.broadcast %cst_54 : f32 to vector<32x32xf32>
    %102 = arith.select %2, %101, %100 : vector<32x32xi1>, vector<32x32xf32>
    %cst_55 = arith.constant dense<0xFF800000> : vector<32xf32>
    %103 = vector.multi_reduction <maximumf>, %102, %cst_55 [1] : vector<32x32xf32> to vector<32xf32>
    %104 = vector.shape_cast %103 : vector<32xf32> to vector<32x1xf32>
    %105 = vector.broadcast %104 : vector<32x1xf32> to vector<32x32xf32>
    %106 = arith.subf %102, %105 : vector<32x32xf32>
    %107 = math.exp %106 : vector<32x32xf32>
    %cst_56 = arith.constant dense<0.000000e+00> : vector<32xf32>
    %108 = vector.multi_reduction <add>, %107, %cst_56 [1] : vector<32x32xf32> to vector<32xf32>
    %109 = vector.shape_cast %108 : vector<32xf32> to vector<32x1xf32>
    %110 = tpu.reciprocal %109 {approx = true} : vector<32x1xf32> -> vector<32x1xf32>
    %111 = vector.broadcast %110 : vector<32x1xf32> to vector<32x32xf32>
    %112 = arith.mulf %107, %111 : vector<32x32xf32>
    %113 = arith.truncf %112 : vector<32x32xf32> to vector<32x32xbf16>
    %114 = vector.extract_strided_slice %40 {offsets = [0, 24], sizes = [32, 8], strides = [1, 1]} : vector<32x32xbf16> to vector<32x8xbf16>
    %cst_57 = arith.constant dense<0.000000e+00> : vector<32x8xf32>
    %115 = tpu.matmul %113, %114, %cst_57 {dimension_numbers = #tpu.dot_dimension_numbers<[1], [0], [0], [1], [0, 0, 1, 1], [], []>} : vector<32x32xbf16>, vector<32x8xbf16>, vector<32x8xf32> -> vector<32x8xf32>
    %c0_58 = arith.constant 0 : index
    %c24 = arith.constant 24 : index
    %116 = vector.load %arg19[%c0_58, %c24] : memref<32x32xf32, #tpu.memory_space<vmem>>, vector<32x8xf32>
    tpu.vector_store %arg19[%c0_58, %c24], %115 {strides = array<i32>} : memref<32x32xf32, #tpu.memory_space<vmem>>, vector<32x8xf32>,
    %c0_59 = arith.constant 0 : index
    %c0_60 = arith.constant 0 : index
    %117 = vector.load %arg19[%c0_59, %c0_60] : memref<32x32xf32, #tpu.memory_space<vmem>>, vector<32x32xf32>
    %118 = arith.truncf %117 : vector<32x32xf32> to vector<32x32xbf16>
    %c0_61 = arith.constant 0 : index
    %c0_62 = arith.constant 0 : index
    %119 = vector.load %arg14[%c0_61, %c0_62] : memref<32x32xbf16, #tpu.memory_space<vmem>>, vector<32x32xbf16>
    %cst_63 = arith.constant dense<0.000000e+00> : vector<32x32xf32>
    %120 = tpu.matmul %118, %119, %cst_63 {dimension_numbers = #tpu.dot_dimension_numbers<[1], [0], [0], [1], [0, 0, 1, 1], [], []>} : vector<32x32xbf16>, vector<32x32xbf16>, vector<32x32xf32> -> vector<32x32xf32>
    %c0_64 = arith.constant 0 : index
    %c0_65 = arith.constant 0 : index
    %121 = vector.load %arg15[%c0_64, %c0_65] : memref<1x32xf32, #tpu.memory_space<vmem>>, vector<1x32xf32>
    %122 = vector.broadcast %121 : vector<1x32xf32> to vector<32x32xf32>
    %123 = arith.addf %120, %122 : vector<32x32xf32>
    %124 = arith.addf %123, %4 : vector<32x32xf32>
    %cst_66 = arith.constant dense<0.000000e+00> : vector<32xf32>
    %125 = vector.multi_reduction <add>, %124, %cst_66 [1] : vector<32x32xf32> to vector<32xf32>
    %126 = vector.shape_cast %125 : vector<32xf32> to vector<32x1xf32>
    %cst_67 = arith.constant 3.200000e+01 : f32
    %127 = vector.broadcast %cst_67 : f32 to vector<32x1xf32>
    %128 = arith.divf %126, %127 : vector<32x1xf32>
    %129 = vector.broadcast %128 : vector<32x1xf32> to vector<32x32xf32>
    %130 = arith.subf %124, %129 : vector<32x32xf32>
    %131 = arith.mulf %130, %130 : vector<32x32xf32>
    %cst_68 = arith.constant dense<0.000000e+00> : vector<32xf32>
    %132 = vector.multi_reduction <add>, %131, %cst_68 [1] : vector<32x32xf32> to vector<32xf32>
    %133 = vector.shape_cast %132 : vector<32xf32> to vector<32x1xf32>
    %cst_69 = arith.constant 3.200000e+01 : f32
    %134 = vector.broadcast %cst_69 : f32 to vector<32x1xf32>
    %135 = arith.divf %133, %134 : vector<32x1xf32>
    %136 = vector.broadcast %128 : vector<32x1xf32> to vector<32x32xf32>
    %137 = arith.subf %124, %136 : vector<32x32xf32>
    %cst_70 = arith.constant 9.99999974E-6 : f32
    %138 = vector.broadcast %cst_70 : f32 to vector<32x1xf32>
    %139 = arith.addf %135, %138 : vector<32x1xf32>
    %140 = math.rsqrt %139 : vector<32x1xf32>
    %141 = vector.broadcast %140 : vector<32x1xf32> to vector<32x32xf32>
    %142 = arith.mulf %137, %141 : vector<32x32xf32>
    %c0_71 = arith.constant 0 : index
    %c0_72 = arith.constant 0 : index
    %143 = vector.load %arg16[%c0_71, %c0_72] : memref<1x32xf32, #tpu.memory_space<vmem>>, vector<1x32xf32>
    %144 = vector.broadcast %143 : vector<1x32xf32> to vector<32x32xf32>
    %145 = arith.mulf %142, %144 : vector<32x32xf32>
    %c0_73 = arith.constant 0 : index
    %c0_74 = arith.constant 0 : index
    %146 = vector.load %arg17[%c0_73, %c0_74] : memref<1x32xf32, #tpu.memory_space<vmem>>, vector<1x32xf32>
    %147 = vector.broadcast %146 : vector<1x32xf32> to vector<32x32xf32>
    %148 = arith.addf %145, %147 : vector<32x32xf32>
    %c0_75 = arith.constant 0 : index
    %c0_76 = arith.constant 0 : index
    %c0_77 = arith.constant 0 : index
    %149 = vector.load %arg18[%c0_75, %c0_76, %c0_77] : memref<1x32x32xf32, #tpu.memory_space<vmem>>, vector<1x32x32xf32>
    %150 = vector.shape_cast %149 : vector<1x32x32xf32> to vector<32x32xf32>
    %151 = vector.shape_cast %148 : vector<32x32xf32> to vector<1x32x32xf32>
    tpu.vector_store %arg18[%c0_75, %c0_76, %c0_77], %151 {strides = array<i32>} : memref<1x32x32xf32, #tpu.memory_space<vmem>>, vector<1x32x32xf32>,
    return
  }
  func.func @transform_0(%arg0: i32) -> (i32, i32, i32) {
    %c0_i32 = arith.constant 0 : i32
    %c0_i32_0 = arith.constant 0 : i32
    %c0_i32_1 = arith.constant 0 : i32
    return %arg0, %c0_i32, %c0_i32_0 : i32, i32, i32
  }
  func.func @transform_1(%arg0: i32) -> (i32, i32, i32) {
    %c0_i32 = arith.constant 0 : i32
    %c0_i32_0 = arith.constant 0 : i32
    %c0_i32_1 = arith.constant 0 : i32
    return %arg0, %c0_i32, %c0_i32_0 : i32, i32, i32
  }
  func.func @transform_2(%arg0: i32) -> (i32, i32, i32) {
    %c0_i32 = arith.constant 0 : i32
    %c0_i32_0 = arith.constant 0 : i32
    %c0_i32_1 = arith.constant 0 : i32
    return %arg0, %c0_i32, %c0_i32_0 : i32, i32, i32
  }
  func.func @transform_3(%arg0: i32) -> (i32, i32, i32) {
    %c0_i32 = arith.constant 0 : i32
    %c0_i32_0 = arith.constant 0 : i32
    %c0_i32_1 = arith.constant 0 : i32
    return %arg0, %c0_i32, %c0_i32_0 : i32, i32, i32
  }
  func.func @transform_4(%arg0: i32) -> (i32, i32) {
    %c0_i32 = arith.constant 0 : i32
    %c0_i32_0 = arith.constant 0 : i32
    %c0_i32_1 = arith.constant 0 : i32
    return %c0_i32, %c0_i32_0 : i32, i32
  }
  func.func @transform_5(%arg0: i32) -> (i32, i32) {
    %c0_i32 = arith.constant 0 : i32
    %c0_i32_0 = arith.constant 0 : i32
    %c0_i32_1 = arith.constant 0 : i32
    return %c0_i32, %c0_i32_0 : i32, i32
  }
  func.func @transform_6(%arg0: i32) -> (i32, i32) {
    %c0_i32 = arith.constant 0 : i32
    %c0_i32_0 = arith.constant 0 : i32
    %c0_i32_1 = arith.constant 0 : i32
    return %c0_i32, %c0_i32_0 : i32, i32
  }
  func.func @transform_7(%arg0: i32) -> (i32, i32) {
    %c0_i32 = arith.constant 0 : i32
    %c0_i32_0 = arith.constant 0 : i32
    %c0_i32_1 = arith.constant 0 : i32
    return %c0_i32, %c0_i32_0 : i32, i32
  }
  func.func @transform_8(%arg0: i32) -> (i32, i32) {
    %c0_i32 = arith.constant 0 : i32
    %c0_i32_0 = arith.constant 0 : i32
    %c0_i32_1 = arith.constant 0 : i32
    return %c0_i32, %c0_i32_0 : i32, i32
  }
  func.func @transform_9(%arg0: i32) -> (i32, i32) {
    %c0_i32 = arith.constant 0 : i32
    %c0_i32_0 = arith.constant 0 : i32
    %c0_i32_1 = arith.constant 0 : i32
    return %c0_i32, %c0_i32_0 : i32, i32
  }
  func.func @transform_10(%arg0: i32) -> (i32, i32) {
    %c0_i32 = arith.constant 0 : i32
    %c0_i32_0 = arith.constant 0 : i32
    %c0_i32_1 = arith.constant 0 : i32
    return %c0_i32, %c0_i32_0 : i32, i32
  }
  func.func @transform_11(%arg0: i32) -> (i32, i32) {
    %c0_i32 = arith.constant 0 : i32
    %c0_i32_0 = arith.constant 0 : i32
    %c0_i32_1 = arith.constant 0 : i32
    return %c0_i32, %c0_i32_0 : i32, i32
  }
  func.func @transform_12(%arg0: i32) -> (i32, i32) {
    %c0_i32 = arith.constant 0 : i32
    %c0_i32_0 = arith.constant 0 : i32
    %c0_i32_1 = arith.constant 0 : i32
    return %c0_i32, %c0_i32_0 : i32, i32
  }
  func.func @transform_13(%arg0: i32) -> (i32, i32) {
    %c0_i32 = arith.constant 0 : i32
    %c0_i32_0 = arith.constant 0 : i32
    %c0_i32_1 = arith.constant 0 : i32
    return %c0_i32, %c0_i32_0 : i32, i32
  }
  func.func @transform_14(%arg0: i32) -> (i32, i32) {
    %c0_i32 = arith.constant 0 : i32
    %c0_i32_0 = arith.constant 0 : i32
    %c0_i32_1 = arith.constant 0 : i32
    return %c0_i32, %c0_i32_0 : i32, i32
  }
  func.func @transform_15(%arg0: i32) -> (i32, i32) {
    %c0_i32 = arith.constant 0 : i32
    %c0_i32_0 = arith.constant 0 : i32
    %c0_i32_1 = arith.constant 0 : i32
    return %c0_i32, %c0_i32_0 : i32, i32
  }
  func.func @transform_16(%arg0: i32) -> (i32, i32) {
    %c0_i32 = arith.constant 0 : i32
    %c0_i32_0 = arith.constant 0 : i32
    %c0_i32_1 = arith.constant 0 : i32
    return %c0_i32, %c0_i32_0 : i32, i32
  }
  func.func @transform_17(%arg0: i32) -> (i32, i32, i32) {
    %c0_i32 = arith.constant 0 : i32
    %c0_i32_0 = arith.constant 0 : i32
    %c0_i32_1 = arith.constant 0 : i32
    return %arg0, %c0_i32, %c0_i32_0 : i32, i32, i32
  }
}

</mosaic_0001>

<llo_original>
// kernel: mha_with_context.1
$region0: #{mha_with_context.1}
  #allocation0 [shape = 'u32[]', space=smem, size = 0x4, offset = 0x4, fixed_abs, tag = 'smem constant byte address 0x4 - core index']
  #allocation1 [shape = 'u32[144,128]{1,0:T(1,128)}', space=vmem, size = 0x12000, scoped, tag = 'internal scratch']
  #allocation2 [shape = 'f32[32,32]{1,0:T(8,128)}', space=vmem, size = 0x4000, scoped, tag = 'scratch operand']
  %s0 = inlined_call_operand.hbm [shape: f32[2,32,32], index: 0, kind: input, shape index: {}]
  %s1 = inlined_call_operand.hbm [shape: f32[2,32,32], index: 1, kind: input, shape index: {}]
  %s2 = inlined_call_operand.hbm [shape: f32[2,32,32], index: 2, kind: input, shape index: {}]
  %s3 = inlined_call_operand.vmem [shape: f32[2,1,32], index: 3, kind: input, shape index: {}]
  %s4 = inlined_call_operand.hbm [shape: f32[32,32], index: 4, kind: input, shape index: {}]
  %s5 = inlined_call_operand.vmem [shape: bf16[32,32], index: 5, kind: input, shape index: {}]
  %s6 = inlined_call_operand.vmem [shape: f32[1,32], index: 6, kind: input, shape index: {}]
  %s7 = inlined_call_operand.hbm [shape: bf16[32,32], index: 7, kind: input, shape index: {}]
  %s8 = inlined_call_operand.hbm [shape: f32[1,32], index: 8, kind: input, shape index: {}]
  %s9 = inlined_call_operand.hbm [shape: bf16[32,32], index: 9, kind: input, shape index: {}]
  %s10 = inlined_call_operand.vmem [shape: f32[1,32], index: 10, kind: input, shape index: {}]
  %s11 = inlined_call_operand.hbm [shape: bf16[32,32], index: 11, kind: input, shape index: {}]
  %s12 = inlined_call_operand.hbm [shape: f32[1,32], index: 12, kind: input, shape index: {}]
  %s13 = inlined_call_operand.hbm [shape: bf16[32,32], index: 13, kind: input, shape index: {}]
  %s14 = inlined_call_operand.hbm [shape: f32[1,32], index: 14, kind: input, shape index: {}]
  %s15 = inlined_call_operand.hbm [shape: f32[1,32], index: 15, kind: input, shape index: {}]
  %s16 = inlined_call_operand.hbm [shape: f32[1,32], index: 16, kind: input, shape index: {}]
  %s17 = inlined_call_operand.hbm [shape: f32[2,32,32], index: 17, kind: output, shape index: {}]
  %s18 = sld [smem:[#allocation0]]
  $region153: #{mha_with_context.1} parent=0
    _
  %s20 = ssub.s32 1, %s18
  %s21 = scalar_select 0, %s20, %s18
  $region1: #{mha_with_context.1} parent=0
    #allocation3 [shape = 'u8[32768]{0}', space=vmem, size = 0x8000, scoped, tag = 'input window, operand 0']
    #allocation4 [shape = 's32[2]{0}', space=sflag, size = 0x8, scoped, tag = 'scoped memory for mha_with_context.1']
    #allocation5 [shape = 's32[2]{0}', space=sflag, size = 0x8, scoped, tag = 'scoped memory for mha_with_context.1']
    #allocation6 [shape = 'u8[32768]{0}', space=vmem, size = 0x8000, scoped, tag = 'input window, operand 1']
    #allocation7 [shape = 's32[2]{0}', space=sflag, size = 0x8, scoped, tag = 'scoped memory for mha_with_context.1']
    #allocation8 [shape = 'u8[32768]{0}', space=vmem, size = 0x8000, scoped, tag = 'input window, operand 2']
    #allocation9 [shape = 'u8[16384]{0}', space=vmem, size = 0x4000, scoped, tag = 'input window, operand 4, single buffered']
    #allocation10 [shape = 's32[1]{0}', space=sflag, size = 0x4, scoped, tag = 'scoped memory for mha_with_context.1']
    #allocation11 [shape = 'u8[8192]{0}', space=vmem, size = 0x2000, scoped, tag = 'input window, operand 7, single buffered']
    #allocation12 [shape = 'u8[512]{0}', space=vmem, size = 0x400, scoped, tag = 'input window, operand 8, single buffered']
    #allocation13 [shape = 's32[1]{0}', space=sflag, size = 0x4, scoped, tag = 'scoped memory for mha_with_context.1']
    #allocation14 [shape = 'u8[8192]{0}', space=vmem, size = 0x2000, scoped, tag = 'input window, operand 9, single buffered']
    #allocation15 [shape = 'u8[8192]{0}', space=vmem, size = 0x2000, scoped, tag = 'input window, operand 11, single buffered']
    #allocation16 [shape = 's32[1]{0}', space=sflag, size = 0x4, scoped, tag = 'scoped memory for mha_with_context.1']
    #allocation17 [shape = 'u8[512]{0}', space=vmem, size = 0x400, scoped, tag = 'input window, operand 12, single buffered']
    #allocation18 [shape = 'u8[8192]{0}', space=vmem, size = 0x2000, scoped, tag = 'input window, operand 13, single buffered']
    #allocation19 [shape = 's32[1]{0}', space=sflag, size = 0x4, scoped, tag = 'scoped memory for mha_with_context.1']
    #allocation20 [shape = 'u8[512]{0}', space=vmem, size = 0x400, scoped, tag = 'input window, operand 14, single buffered']
    #allocation21 [shape = 'u8[512]{0}', space=vmem, size = 0x400, scoped, tag = 'input window, operand 15, single buffered']
    #allocation22 [shape = 's32[1]{0}', space=sflag, size = 0x4, scoped, tag = 'scoped memory for mha_with_context.1']
    #allocation23 [shape = 'u8[512]{0}', space=vmem, size = 0x400, scoped, tag = 'input window, operand 16, single buffered']
    #allocation24 [shape = 'u8[32768]{0}', space=vmem, size = 0x8000, scoped, tag = 'output window, operand 0']
    %22 = vsyncpa [#allocation4], 0
    %s23 = scalar_lea.sflag [#allocation4], 1
    %24 = vsyncpa %s23, 0
    %25 = vsyncpa [#allocation7], 0
    %s26 = scalar_lea.sflag [#allocation7], 1
    %27 = vsyncpa %s26, 0
    %28 = vsyncpa [#allocation10], 0
    %29 = vsyncpa [#allocation13], 0
    %30 = vsyncpa [#allocation16], 0
    %31 = vsyncpa [#allocation19], 0
    %32 = vsyncpa [#allocation22], 0
    %33 = vsyncpa [#allocation5], 0
    %s34 = scalar_lea.sflag [#allocation5], 1
    %35 = vsyncpa %s34, 0
    loop: start=0, step=1, limit=4
    $region2: #{mha_with_context.1} parent=1 // loop_pre_header
      _
    $region3: #{mha_with_context.1} parent=1 // loop_header
      %s37 = sphi 0, %s41
      %p38 = scmp.ge.s32.totalorder %s37, 4
      %s47 = sphi 0, %s49
      %s50 = sphi 0, %s47
      %s51 = sphi 0, %s50
      %s67 = sphi 0, %s51
      %s73 = sphi 0, %s75
      %s76 = sphi 0, %s73
      %s77 = sphi 0, %s76
      %s93 = sphi 0, %s77
      %s99 = sphi 0, %s101
      %s102 = sphi 0, %s99
      %s103 = sphi 0, %s102
      %s119 = sphi 0, %s103
      %s125 = sphi 0, %s127
      %s128 = sphi 0, %s125
      %s129 = sphi 0, %s128
      %s145 = sphi 0, %s129
      %s149 = sphi 0, %s149
      %s151 = sphi 0, %s149
      %s152 = sphi 0, %s151
      %s166 = sphi 0, %s152
      %s170 = sphi 0, %s170
      %s172 = sphi 0, %s170
      %s173 = sphi 0, %s172
      %s187 = sphi 0, %s173
      %s191 = sphi 0, %s191
      %s193 = sphi 0, %s191
      %s194 = sphi 0, %s193
      %s208 = sphi 0, %s194
      %s212 = sphi 0, %s212
      %s214 = sphi 0, %s212
      %s215 = sphi 0, %s214
      %s229 = sphi 0, %s215
      %s233 = sphi 0, %s233
      %s235 = sphi 0, %s233
      %s236 = sphi 0, %s235
      %s250 = sphi 0, %s236
      %s254 = sphi 0, %s254
      %s256 = sphi 0, %s254
      %s257 = sphi 0, %s256
      %s271 = sphi 0, %s257
      %s275 = sphi 0, %s275
      %s277 = sphi 0, %s275
      %s278 = sphi 0, %s277
      %s292 = sphi 0, %s278
      %s296 = sphi 0, %s296
      %s298 = sphi 0, %s296
      %s299 = sphi 0, %s298
      %s313 = sphi 0, %s299
      %s317 = sphi 0, %s317
      %s319 = sphi 0, %s317
      %s320 = sphi 0, %s319
      %s334 = sphi 0, %s320
      %s338 = sphi 0, %s338
      %s340 = sphi 0, %s338
      %s341 = sphi 0, %s340
      %s355 = sphi 0, %s341
      %s359 = sphi 0, %s359
      %s361 = sphi 0, %s359
      %s362 = sphi 0, %s361
      %s376 = sphi 0, %s362
      %s380 = sphi 0, %s380
      %s382 = sphi 0, %s380
      %s383 = sphi 0, %s382
      %s397 = sphi 0, %s383
      %s401 = sphi 0, %s401
      %s403 = sphi 0, %s401
      %s404 = sphi 0, %s403
      %s418 = sphi 0, %s404
      %s424 = sphi 0, %s426
      %s427 = sphi 0, %s424
      %s428 = sphi 0, %s427
      %s444 = sphi 0, %s428
    $region4: #{mha_with_context.1} parent=1 // loop_header_branch
      %40 = sbr.rel (%p38) target = $region8
    $region5: #{mha_with_context.1} parent=1 // loop_body
      %s42 = ssub.s32 %s37, 1
      %s43 = ssub.s32 %s37, 2
      %s44 = sadd.s32 %s37, 1
      %s45 = ssub.s32 %s37, %s44
      %p46 = scmp.eq.s32.totalorder %s45, 0
      %s48 = sadd.s32 %s47, 1
      %s49 = scalar_select %p46, %s47, %s48
      %p52 = pneg %p46
      %p53 = scmp.eq.s32.totalorder %s37, 1
      %p54 = por %p52, %p53
      %p55 = scmp.ne.s32.totalorder %s47, %s50
      %p56 = scmp.eq.s32.totalorder %s37, 0
      %p57 = por %p55, %p56
      %p58 = scmp.ne.s32.totalorder %s47, %s50
      %p59 = scmp.eq.s32.totalorder %s42, 1
      %p60 = por %p58, %p59
      %p61 = scmp.ne.s32.totalorder %s50, %s51
      %p62 = scmp.eq.s32.totalorder %s42, 0
      %p63 = por %p61, %p62
      %p64 = scmp.ne.s32.totalorder %s50, %s51
      %p65 = scmp.eq.s32.totalorder %s43, 1
      %p66 = por %p64, %p65
      %p68 = scmp.ne.s32.totalorder %s51, %s67
      %p69 = scmp.eq.s32.totalorder %s43, 0
      %p70 = por %p68, %p69
      %s71 = ssub.s32 %s37, %s44
      %p72 = scmp.eq.s32.totalorder %s71, 0
      %s74 = sadd.s32 %s73, 1
      %s75 = scalar_select %p72, %s73, %s74
      %p78 = pneg %p72
      %p79 = scmp.eq.s32.totalorder %s37, 1
      %p80 = por %p78, %p79
      %p81 = scmp.ne.s32.totalorder %s73, %s76
      %p82 = scmp.eq.s32.totalorder %s37, 0
      %p83 = por %p81, %p82
      %p84 = scmp.ne.s32.totalorder %s73, %s76
      %p85 = scmp.eq.s32.totalorder %s42, 1
      %p86 = por %p84, %p85
      %p87 = scmp.ne.s32.totalorder %s76, %s77
      %p88 = scmp.eq.s32.totalorder %s42, 0
      %p89 = por %p87, %p88
      %p90 = scmp.ne.s32.totalorder %s76, %s77
      %p91 = scmp.eq.s32.totalorder %s43, 1
      %p92 = por %p90, %p91
      %p94 = scmp.ne.s32.totalorder %s77, %s93
      %p95 = scmp.eq.s32.totalorder %s43, 0
      %p96 = por %p94, %p95
      %s97 = ssub.s32 %s37, %s44
      %p98 = scmp.eq.s32.totalorder %s97, 0
      %s100 = sadd.s32 %s99, 1
      %s101 = scalar_select %p98, %s99, %s100
      %p104 = pneg %p98
      %p105 = scmp.eq.s32.totalorder %s37, 1
      %p106 = por %p104, %p105
      %p107 = scmp.ne.s32.totalorder %s99, %s102
      %p108 = scmp.eq.s32.totalorder %s37, 0
      %p109 = por %p107, %p108
      %p110 = scmp.ne.s32.totalorder %s99, %s102
      %p111 = scmp.eq.s32.totalorder %s42, 1
      %p112 = por %p110, %p111
      %p113 = scmp.ne.s32.totalorder %s102, %s103
      %p114 = scmp.eq.s32.totalorder %s42, 0
      %p115 = por %p113, %p114
      %p116 = scmp.ne.s32.totalorder %s102, %s103
      %p117 = scmp.eq.s32.totalorder %s43, 1
      %p118 = por %p116, %p117
      %p120 = scmp.ne.s32.totalorder %s103, %s119
      %p121 = scmp.eq.s32.totalorder %s43, 0
      %p122 = por %p120, %p121
      %s123 = ssub.s32 %s37, %s44
      %p124 = scmp.eq.s32.totalorder %s123, 0
      %s126 = sadd.s32 %s125, 1
      %s127 = scalar_select %p124, %s125, %s126
      %p130 = pneg %p124
      %p131 = scmp.eq.s32.totalorder %s37, 1
      %p132 = por %p130, %p131
      %p133 = scmp.ne.s32.totalorder %s125, %s128
      %p134 = scmp.eq.s32.totalorder %s37, 0
      %p135 = por %p133, %p134
      %p136 = scmp.ne.s32.totalorder %s125, %s128
      %p137 = scmp.eq.s32.totalorder %s42, 1
      %p138 = por %p136, %p137
      %p139 = scmp.ne.s32.totalorder %s128, %s129
      %p140 = scmp.eq.s32.totalorder %s42, 0
      %p141 = por %p139, %p140
      %p142 = scmp.ne.s32.totalorder %s128, %s129
      %p143 = scmp.eq.s32.totalorder %s43, 1
      %p144 = por %p142, %p143
      %p146 = scmp.ne.s32.totalorder %s129, %s145
      %p147 = scmp.eq.s32.totalorder %s43, 0
      %p148 = por %p146, %p147
      %s150 = sadd.s32 %s149, 1
      %p153 = scmp.eq.s32.totalorder %s37, 1
      %p154 = scmp.ne.s32.totalorder %s149, %s151
      %p155 = scmp.eq.s32.totalorder %s37, 0
      %p156 = por %p154, %p155
      %p157 = scmp.ne.s32.totalorder %s149, %s151
      %p158 = scmp.eq.s32.totalorder %s42, 1
      %p159 = por %p157, %p158
      %p160 = scmp.ne.s32.totalorder %s151, %s152
      %p161 = scmp.eq.s32.totalorder %s42, 0
      %p162 = por %p160, %p161
      %p163 = scmp.ne.s32.totalorder %s151, %s152
      %p164 = scmp.eq.s32.totalorder %s43, 1
      %p165 = por %p163, %p164
      %p167 = scmp.ne.s32.totalorder %s152, %s166
      %p168 = scmp.eq.s32.totalorder %s43, 0
      %p169 = por %p167, %p168
      %s171 = sadd.s32 %s170, 1
      %p174 = scmp.eq.s32.totalorder %s37, 1
      %p175 = scmp.ne.s32.totalorder %s170, %s172
      %p176 = scmp.eq.s32.totalorder %s37, 0
      %p177 = por %p175, %p176
      %p178 = scmp.ne.s32.totalorder %s170, %s172
      %p179 = scmp.eq.s32.totalorder %s42, 1
      %p180 = por %p178, %p179
      %p181 = scmp.ne.s32.totalorder %s172, %s173
      %p182 = scmp.eq.s32.totalorder %s42, 0
      %p183 = por %p181, %p182
      %p184 = scmp.ne.s32.totalorder %s172, %s173
      %p185 = scmp.eq.s32.totalorder %s43, 1
      %p186 = por %p184, %p185
      %p188 = scmp.ne.s32.totalorder %s173, %s187
      %p189 = scmp.eq.s32.totalorder %s43, 0
      %p190 = por %p188, %p189
      %s192 = sadd.s32 %s191, 1
      %p195 = scmp.eq.s32.totalorder %s37, 1
      %p196 = scmp.ne.s32.totalorder %s191, %s193
      %p197 = scmp.eq.s32.totalorder %s37, 0
      %p198 = por %p196, %p197
      %p199 = scmp.ne.s32.totalorder %s191, %s193
      %p200 = scmp.eq.s32.totalorder %s42, 1
      %p201 = por %p199, %p200
      %p202 = scmp.ne.s32.totalorder %s193, %s194
      %p203 = scmp.eq.s32.totalorder %s42, 0
      %p204 = por %p202, %p203
      %p205 = scmp.ne.s32.totalorder %s193, %s194
      %p206 = scmp.eq.s32.totalorder %s43, 1
      %p207 = por %p205, %p206
      %p209 = scmp.ne.s32.totalorder %s194, %s208
      %p210 = scmp.eq.s32.totalorder %s43, 0
      %p211 = por %p209, %p210
      %s213 = sadd.s32 %s212, 1
      %p216 = scmp.eq.s32.totalorder %s37, 1
      %p217 = scmp.ne.s32.totalorder %s212, %s214
      %p218 = scmp.eq.s32.totalorder %s37, 0
      %p219 = por %p217, %p218
      %p220 = scmp.ne.s32.totalorder %s212, %s214
      %p221 = scmp.eq.s32.totalorder %s42, 1
      %p222 = por %p220, %p221
      %p223 = scmp.ne.s32.totalorder %s214, %s215
      %p224 = scmp.eq.s32.totalorder %s42, 0
      %p225 = por %p223, %p224
      %p226 = scmp.ne.s32.totalorder %s214, %s215
      %p227 = scmp.eq.s32.totalorder %s43, 1
      %p228 = por %p226, %p227
      %p230 = scmp.ne.s32.totalorder %s215, %s229
      %p231 = scmp.eq.s32.totalorder %s43, 0
      %p232 = por %p230, %p231
      %s234 = sadd.s32 %s233, 1
      %p237 = scmp.eq.s32.totalorder %s37, 1
      %p238 = scmp.ne.s32.totalorder %s233, %s235
      %p239 = scmp.eq.s32.totalorder %s37, 0
      %p240 = por %p238, %p239
      %p241 = scmp.ne.s32.totalorder %s233, %s235
      %p242 = scmp.eq.s32.totalorder %s42, 1
      %p243 = por %p241, %p242
      %p244 = scmp.ne.s32.totalorder %s235, %s236
      %p245 = scmp.eq.s32.totalorder %s42, 0
      %p246 = por %p244, %p245
      %p247 = scmp.ne.s32.totalorder %s235, %s236
      %p248 = scmp.eq.s32.totalorder %s43, 1
      %p249 = por %p247, %p248
      %p251 = scmp.ne.s32.totalorder %s236, %s250
      %p252 = scmp.eq.s32.totalorder %s43, 0
      %p253 = por %p251, %p252
      %s255 = sadd.s32 %s254, 1
      %p258 = scmp.eq.s32.totalorder %s37, 1
      %p259 = scmp.ne.s32.totalorder %s254, %s256
      %p260 = scmp.eq.s32.totalorder %s37, 0
      %p261 = por %p259, %p260
      %p262 = scmp.ne.s32.totalorder %s254, %s256
      %p263 = scmp.eq.s32.totalorder %s42, 1
      %p264 = por %p262, %p263
      %p265 = scmp.ne.s32.totalorder %s256, %s257
      %p266 = scmp.eq.s32.totalorder %s42, 0
      %p267 = por %p265, %p266
      %p268 = scmp.ne.s32.totalorder %s256, %s257
      %p269 = scmp.eq.s32.totalorder %s43, 1
      %p270 = por %p268, %p269
      %p272 = scmp.ne.s32.totalorder %s257, %s271
      %p273 = scmp.eq.s32.totalorder %s43, 0
      %p274 = por %p272, %p273
      %s276 = sadd.s32 %s275, 1
      %p279 = scmp.eq.s32.totalorder %s37, 1
      %p280 = scmp.ne.s32.totalorder %s275, %s277
      %p281 = scmp.eq.s32.totalorder %s37, 0
      %p282 = por %p280, %p281
      %p283 = scmp.ne.s32.totalorder %s275, %s277
      %p284 = scmp.eq.s32.totalorder %s42, 1
      %p285 = por %p283, %p284
      %p286 = scmp.ne.s32.totalorder %s277, %s278
      %p287 = scmp.eq.s32.totalorder %s42, 0
      %p288 = por %p286, %p287
      %p289 = scmp.ne.s32.totalorder %s277, %s278
      %p290 = scmp.eq.s32.totalorder %s43, 1
      %p291 = por %p289, %p290
      %p293 = scmp.ne.s32.totalorder %s278, %s292
      %p294 = scmp.eq.s32.totalorder %s43, 0
      %p295 = por %p293, %p294
      %s297 = sadd.s32 %s296, 1
      %p300 = scmp.eq.s32.totalorder %s37, 1
      %p301 = scmp.ne.s32.totalorder %s296, %s298
      %p302 = scmp.eq.s32.totalorder %s37, 0
      %p303 = por %p301, %p302
      %p304 = scmp.ne.s32.totalorder %s296, %s298
      %p305 = scmp.eq.s32.totalorder %s42, 1
      %p306 = por %p304, %p305
      %p307 = scmp.ne.s32.totalorder %s298, %s299
      %p308 = scmp.eq.s32.totalorder %s42, 0
      %p309 = por %p307, %p308
      %p310 = scmp.ne.s32.totalorder %s298, %s299
      %p311 = scmp.eq.s32.totalorder %s43, 1
      %p312 = por %p310, %p311
      %p314 = scmp.ne.s32.totalorder %s299, %s313
      %p315 = scmp.eq.s32.totalorder %s43, 0
      %p316 = por %p314, %p315
      %s318 = sadd.s32 %s317, 1
      %p321 = scmp.eq.s32.totalorder %s37, 1
      %p322 = scmp.ne.s32.totalorder %s317, %s319
      %p323 = scmp.eq.s32.totalorder %s37, 0
      %p324 = por %p322, %p323
      %p325 = scmp.ne.s32.totalorder %s317, %s319
      %p326 = scmp.eq.s32.totalorder %s42, 1
      %p327 = por %p325, %p326
      %p328 = scmp.ne.s32.totalorder %s319, %s320
      %p329 = scmp.eq.s32.totalorder %s42, 0
      %p330 = por %p328, %p329
      %p331 = scmp.ne.s32.totalorder %s319, %s320
      %p332 = scmp.eq.s32.totalorder %s43, 1
      %p333 = por %p331, %p332
      %p335 = scmp.ne.s32.totalorder %s320, %s334
      %p336 = scmp.eq.s32.totalorder %s43, 0
      %p337 = por %p335, %p336
      %s339 = sadd.s32 %s338, 1
      %p342 = scmp.eq.s32.totalorder %s37, 1
      %p343 = scmp.ne.s32.totalorder %s338, %s340
      %p344 = scmp.eq.s32.totalorder %s37, 0
      %p345 = por %p343, %p344
      %p346 = scmp.ne.s32.totalorder %s338, %s340
      %p347 = scmp.eq.s32.totalorder %s42, 1
      %p348 = por %p346, %p347
      %p349 = scmp.ne.s32.totalorder %s340, %s341
      %p350 = scmp.eq.s32.totalorder %s42, 0
      %p351 = por %p349, %p350
      %p352 = scmp.ne.s32.totalorder %s340, %s341
      %p353 = scmp.eq.s32.totalorder %s43, 1
      %p354 = por %p352, %p353
      %p356 = scmp.ne.s32.totalorder %s341, %s355
      %p357 = scmp.eq.s32.totalorder %s43, 0
      %p358 = por %p356, %p357
      %s360 = sadd.s32 %s359, 1
      %p363 = scmp.eq.s32.totalorder %s37, 1
      %p364 = scmp.ne.s32.totalorder %s359, %s361
      %p365 = scmp.eq.s32.totalorder %s37, 0
      %p366 = por %p364, %p365
      %p367 = scmp.ne.s32.totalorder %s359, %s361
      %p368 = scmp.eq.s32.totalorder %s42, 1
      %p369 = por %p367, %p368
      %p370 = scmp.ne.s32.totalorder %s361, %s362
      %p371 = scmp.eq.s32.totalorder %s42, 0
      %p372 = por %p370, %p371
      %p373 = scmp.ne.s32.totalorder %s361, %s362
      %p374 = scmp.eq.s32.totalorder %s43, 1
      %p375 = por %p373, %p374
      %p377 = scmp.ne.s32.totalorder %s362, %s376
      %p378 = scmp.eq.s32.totalorder %s43, 0
      %p379 = por %p377, %p378
      %s381 = sadd.s32 %s380, 1
      %p384 = scmp.eq.s32.totalorder %s37, 1
      %p385 = scmp.ne.s32.totalorder %s380, %s382
      %p386 = scmp.eq.s32.totalorder %s37, 0
      %p387 = por %p385, %p386
      %p388 = scmp.ne.s32.totalorder %s380, %s382
      %p389 = scmp.eq.s32.totalorder %s42, 1
      %p390 = por %p388, %p389
      %p391 = scmp.ne.s32.totalorder %s382, %s383
      %p392 = scmp.eq.s32.totalorder %s42, 0
      %p393 = por %p391, %p392
      %p394 = scmp.ne.s32.totalorder %s382, %s383
      %p395 = scmp.eq.s32.totalorder %s43, 1
      %p396 = por %p394, %p395
      %p398 = scmp.ne.s32.totalorder %s383, %s397
      %p399 = scmp.eq.s32.totalorder %s43, 0
      %p400 = por %p398, %p399
      %s402 = sadd.s32 %s401, 1
      %p405 = scmp.eq.s32.totalorder %s37, 1
      %p406 = scmp.ne.s32.totalorder %s401, %s403
      %p407 = scmp.eq.s32.totalorder %s37, 0
      %p408 = por %p406, %p407
      %p409 = scmp.ne.s32.totalorder %s401, %s403
      %p410 = scmp.eq.s32.totalorder %s42, 1
      %p411 = por %p409, %p410
      %p412 = scmp.ne.s32.totalorder %s403, %s404
      %p413 = scmp.eq.s32.totalorder %s42, 0
      %p414 = por %p412, %p413
      %p415 = scmp.ne.s32.totalorder %s403, %s404
      %p416 = scmp.eq.s32.totalorder %s43, 1
      %p417 = por %p415, %p416
      %p419 = scmp.ne.s32.totalorder %s404, %s418
      %p420 = scmp.eq.s32.totalorder %s43, 0
      %p421 = por %p419, %p420
      %s422 = ssub.s32 %s37, %s44
      %p423 = scmp.eq.s32.totalorder %s422, 0
      %s425 = sadd.s32 %s424, 1
      %s426 = scalar_select %p423, %s424, %s425
      %p429 = pneg %p423
      %p430 = scmp.eq.s32.totalorder %s37, 1
      %p431 = por %p429, %p430
      %p432 = scmp.ne.s32.totalorder %s424, %s427
      %p433 = scmp.eq.s32.totalorder %s37, 0
      %p434 = por %p432, %p433
      %p435 = scmp.ne.s32.totalorder %s424, %s427
      %p436 = scmp.eq.s32.totalorder %s42, 1
      %p437 = por %p435, %p436
      %p438 = scmp.ne.s32.totalorder %s427, %s428
      %p439 = scmp.eq.s32.totalorder %s42, 0
      %p440 = por %p438, %p439
      %p441 = scmp.ne.s32.totalorder %s427, %s428
      %p442 = scmp.eq.s32.totalorder %s43, 1
      %p443 = por %p441, %p442
      %p445 = scmp.ne.s32.totalorder %s428, %s444
      %p446 = scmp.eq.s32.totalorder %s43, 0
      %p447 = por %p445, %p446
      %p448 = scmp.le.s32.totalorder 1, %s37
      %p449 = scmp.lt.s32.totalorder %s37, 3
      %p450 = pnand %p448, %p449
      %p451 = pneg %p450
      // Predicated region
      $region9: #{mha_with_context.1} parent=5 // pred_check
        _
      $region10: #{mha_with_context.1} parent=5 // pred_check_branch
        %453 = sbr.rel (%p450) target = $region12
      $region11: #{mha_with_context.1} parent=5 // pred_region
        %s454 = ssub.s32 %s37, 1
        // Predicated region
        $region13: #{mha_with_context.1} parent=11 // pred_check
          %p455 = pneg %p162
        $region14: #{mha_with_context.1} parent=11 // pred_check_branch
          %457 = sbr.rel (%p455) target = $region16
        $region15: #{mha_with_context.1} parent=11 // pred_region
          %s459 = ssub.s32 512, 512
          %460 = vsyncadd [#allocation10], %s459
          %s461 = sshll.u32 [#allocation9], 4
          %s462 = int_to_ptr.vmem [resolvable:$true] %s461
          %467 = dma.hbm_to_vmem [thread:$0]  %s4, 512, %s462, [#allocation10], 128, 128, 8
        $region16: #{mha_with_context.1} parent=11 // pred_fallthru
          _
        // Predicated region
        $region17: #{mha_with_context.1} parent=11 // pred_check
          %p468 = pneg %p183
        $region18: #{mha_with_context.1} parent=11 // pred_check_branch
          %470 = sbr.rel (%p468) target = $region20
        $region19: #{mha_with_context.1} parent=11 // pred_region
          _
        $region20: #{mha_with_context.1} parent=11 // pred_fallthru
          _
        // Predicated region
        $region21: #{mha_with_context.1} parent=11 // pred_check
          %p471 = pneg %p204
        $region22: #{mha_with_context.1} parent=11 // pred_check_branch
          %473 = sbr.rel (%p471) target = $region24
        $region23: #{mha_with_context.1} parent=11 // pred_region
          _
        $region24: #{mha_with_context.1} parent=11 // pred_fallthru
          _
        // Predicated region
        $region25: #{mha_with_context.1} parent=11 // pred_check
          %p474 = pneg %p225
        $region26: #{mha_with_context.1} parent=11 // pred_check_branch
          %476 = sbr.rel (%p474) target = $region28
        $region27: #{mha_with_context.1} parent=11 // pred_region
          %s478 = ssub.s32 256, 256
          %479 = vsyncadd [#allocation10], %s478
          %s480 = sshll.u32 [#allocation11], 4
          %s481 = int_to_ptr.vmem [resolvable:$true] %s480
          %486 = dma.hbm_to_vmem [thread:$0]  %s7, 256, %s481, [#allocation10], 64, 64, 4
        $region28: #{mha_with_context.1} parent=11 // pred_fallthru
          _
        // Predicated region
        $region29: #{mha_with_context.1} parent=11 // pred_check
          %p487 = pneg %p246
        $region30: #{mha_with_context.1} parent=11 // pred_check_branch
          %489 = sbr.rel (%p487) target = $region32
        $region31: #{mha_with_context.1} parent=11 // pred_region
          %s491 = ssub.s32 16, 16
          %492 = vsyncadd [#allocation13], %s491
          %s494 = sshll.u32 [#allocation12], 4
          %s495 = int_to_ptr.vmem [resolvable:$true] %s494
          %497 = dma.hbm_to_vmem [thread:$0]  %s8, 16, %s495, [#allocation13]
        $region32: #{mha_with_context.1} parent=11 // pred_fallthru
          _
        // Predicated region
        $region33: #{mha_with_context.1} parent=11 // pred_check
          %p498 = pneg %p267
        $region34: #{mha_with_context.1} parent=11 // pred_check_branch
          %500 = sbr.rel (%p498) target = $region36
        $region35: #{mha_with_context.1} parent=11 // pred_region
          %s502 = ssub.s32 256, 256
          %503 = vsyncadd [#allocation13], %s502
          %s504 = sshll.u32 [#allocation14], 4
          %s505 = int_to_ptr.vmem [resolvable:$true] %s504
          %510 = dma.hbm_to_vmem [thread:$0]  %s9, 256, %s505, [#allocation13], 64, 64, 4
        $region36: #{mha_with_context.1} parent=11 // pred_fallthru
          _
        // Predicated region
        $region37: #{mha_with_context.1} parent=11 // pred_check
          %p511 = pneg %p288
        $region38: #{mha_with_context.1} parent=11 // pred_check_branch
          %513 = sbr.rel (%p511) target = $region40
        $region39: #{mha_with_context.1} parent=11 // pred_region
          _
        $region40: #{mha_with_context.1} parent=11 // pred_fallthru
          _
        // Predicated region
        $region41: #{mha_with_context.1} parent=11 // pred_check
          %p514 = pneg %p309
        $region42: #{mha_with_context.1} parent=11 // pred_check_branch
          %516 = sbr.rel (%p514) target = $region44
        $region43: #{mha_with_context.1} parent=11 // pred_region
          %s518 = ssub.s32 256, 256
          %519 = vsyncadd [#allocation16], %s518
          %s520 = sshll.u32 [#allocation15], 4
          %s521 = int_to_ptr.vmem [resolvable:$true] %s520
          %526 = dma.hbm_to_vmem [thread:$0]  %s11, 256, %s521, [#allocation16], 64, 64, 4
        $region44: #{mha_with_context.1} parent=11 // pred_fallthru
          _
        // Predicated region
        $region45: #{mha_with_context.1} parent=11 // pred_check
          %p527 = pneg %p330
        $region46: #{mha_with_context.1} parent=11 // pred_check_branch
          %529 = sbr.rel (%p527) target = $region48
        $region47: #{mha_with_context.1} parent=11 // pred_region
          %s531 = ssub.s32 16, 16
          %532 = vsyncadd [#allocation16], %s531
          %s534 = sshll.u32 [#allocation17], 4
          %s535 = int_to_ptr.vmem [resolvable:$true] %s534
          %537 = dma.hbm_to_vmem [thread:$0]  %s12, 16, %s535, [#allocation16]
        $region48: #{mha_with_context.1} parent=11 // pred_fallthru
          _
        // Predicated region
        $region49: #{mha_with_context.1} parent=11 // pred_check
          %p538 = pneg %p351
        $region50: #{mha_with_context.1} parent=11 // pred_check_branch
          %540 = sbr.rel (%p538) target = $region52
        $region51: #{mha_with_context.1} parent=11 // pred_region
          %s542 = ssub.s32 256, 256
          %543 = vsyncadd [#allocation19], %s542
          %s544 = sshll.u32 [#allocation18], 4
          %s545 = int_to_ptr.vmem [resolvable:$true] %s544
          %550 = dma.hbm_to_vmem [thread:$0]  %s13, 256, %s545, [#allocation19], 64, 64, 4
        $region52: #{mha_with_context.1} parent=11 // pred_fallthru
          _
        // Predicated region
        $region53: #{mha_with_context.1} parent=11 // pred_check
          %p551 = pneg %p372
        $region54: #{mha_with_context.1} parent=11 // pred_check_branch
          %553 = sbr.rel (%p551) target = $region56
        $region55: #{mha_with_context.1} parent=11 // pred_region
          %s555 = ssub.s32 16, 16
          %556 = vsyncadd [#allocation19], %s555
          %s558 = sshll.u32 [#allocation20], 4
          %s559 = int_to_ptr.vmem [resolvable:$true] %s558
          %561 = dma.hbm_to_vmem [thread:$0]  %s14, 16, %s559, [#allocation19]
        $region56: #{mha_with_context.1} parent=11 // pred_fallthru
          _
        // Predicated region
        $region57: #{mha_with_context.1} parent=11 // pred_check
          %p562 = pneg %p393
        $region58: #{mha_with_context.1} parent=11 // pred_check_branch
          %564 = sbr.rel (%p562) target = $region60
        $region59: #{mha_with_context.1} parent=11 // pred_region
          %s566 = ssub.s32 16, 16
          %567 = vsyncadd [#allocation22], %s566
          %s569 = sshll.u32 [#allocation21], 4
          %s570 = int_to_ptr.vmem [resolvable:$true] %s569
          %572 = dma.hbm_to_vmem [thread:$0]  %s15, 16, %s570, [#allocation22]
        $region60: #{mha_with_context.1} parent=11 // pred_fallthru
          _
        // Predicated region
        $region61: #{mha_with_context.1} parent=11 // pred_check
          %p573 = pneg %p414
        $region62: #{mha_with_context.1} parent=11 // pred_check_branch
          %575 = sbr.rel (%p573) target = $region64
        $region63: #{mha_with_context.1} parent=11 // pred_region
          %s577 = ssub.s32 16, 16
          %578 = vsyncadd [#allocation22], %s577
          %s580 = sshll.u32 [#allocation23], 4
          %s581 = int_to_ptr.vmem [resolvable:$true] %s580
          %583 = dma.hbm_to_vmem [thread:$0]  %s16, 16, %s581, [#allocation22]
        $region64: #{mha_with_context.1} parent=11 // pred_fallthru
          _
      $region12: #{mha_with_context.1} parent=5 // pred_fallthru
        _
      %p584 = scmp.lt.s32.totalorder %s37, 2
      // Predicated region
      $region65: #{mha_with_context.1} parent=5 // pred_check
        %p585 = pneg %p584
      $region66: #{mha_with_context.1} parent=5 // pred_check_branch
        %587 = sbr.rel (%p585) target = $region68
      $region67: #{mha_with_context.1} parent=5 // pred_region
        // Predicated region
        $region69: #{mha_with_context.1} parent=67 // pred_check
          %p588 = pneg %p57
        $region70: #{mha_with_context.1} parent=67 // pred_check_branch
          %590 = sbr.rel (%p588) target = $region72
        $region71: #{mha_with_context.1} parent=67 // pred_region
          %s591 = sand.u32 %s47, 1
          %s592 = scalar_lea.sflag [#allocation4], %s591
          %s593 = sand.u32 %s47, 1
          %s594 = smul.addr %s593, 32
          %s595 = scalar_lea.vmem [#allocation3], %s594
          %s597 = ssub.s32 512, 512
          %598 = vsyncadd %s592, %s597
          %s599 = smul.addr %s37, 4
          %s600 = smul.addr %s599, 128
          %s601 = scalar_lea.hbm %s0, %s600
          %s602 = sshll.u32 %s595, 4
          %s603 = int_to_ptr.vmem [resolvable:$true] %s602
          %608 = dma.hbm_to_vmem [thread:$0]  %s601, 512, %s603, %s592, 128, 128, 8
        $region72: #{mha_with_context.1} parent=67 // pred_fallthru
          _
        // Predicated region
        $region73: #{mha_with_context.1} parent=67 // pred_check
          %p609 = pneg %p83
        $region74: #{mha_with_context.1} parent=67 // pred_check_branch
          %611 = sbr.rel (%p609) target = $region76
        $region75: #{mha_with_context.1} parent=67 // pred_region
          %s612 = sand.u32 %s37, 1
          %s613 = scalar_lea.sflag [#allocation7], %s612
          %s614 = sand.u32 %s73, 1
          %s615 = smul.addr %s614, 32
          %s616 = scalar_lea.vmem [#allocation6], %s615
          %s618 = ssub.s32 512, 512
          %619 = vsyncadd %s613, %s618
          %s620 = smul.addr %s37, 4
          %s621 = smul.addr %s620, 128
          %s622 = scalar_lea.hbm %s1, %s621
          %s623 = sshll.u32 %s616, 4
          %s624 = int_to_ptr.vmem [resolvable:$true] %s623
          %629 = dma.hbm_to_vmem [thread:$0]  %s622, 512, %s624, %s613, 128, 128, 8
        $region76: #{mha_with_context.1} parent=67 // pred_fallthru
          _
        // Predicated region
        $region77: #{mha_with_context.1} parent=67 // pred_check
          %p630 = pneg %p109
        $region78: #{mha_with_context.1} parent=67 // pred_check_branch
          %632 = sbr.rel (%p630) target = $region80
        $region79: #{mha_with_context.1} parent=67 // pred_region
          %s633 = sand.u32 %s37, 1
          %s634 = scalar_lea.sflag [#allocation7], %s633
          %s635 = sand.u32 %s99, 1
          %s636 = smul.addr %s635, 32
          %s637 = scalar_lea.vmem [#allocation8], %s636
          %s639 = ssub.s32 512, 512
          %640 = vsyncadd %s634, %s639
          %s641 = smul.addr %s37, 4
          %s642 = smul.addr %s641, 128
          %s643 = scalar_lea.hbm %s2, %s642
          %s644 = sshll.u32 %s637, 4
          %s645 = int_to_ptr.vmem [resolvable:$true] %s644
          %650 = dma.hbm_to_vmem [thread:$0]  %s643, 512, %s645, %s634, 128, 128, 8
        $region80: #{mha_with_context.1} parent=67 // pred_fallthru
          _
        // Predicated region
        $region81: #{mha_with_context.1} parent=67 // pred_check
          %p651 = pneg %p135
        $region82: #{mha_with_context.1} parent=67 // pred_check_branch
          %653 = sbr.rel (%p651) target = $region84
        $region83: #{mha_with_context.1} parent=67 // pred_region
          %p654 = scmp.lt.s32.totalorder %s37, 1
          %s655 = scalar_select %p654, %s37, 1
          %s656 = scalar_lea.vmem %s3, %s655
        $region84: #{mha_with_context.1} parent=67 // pred_fallthru
          _
      $region68: #{mha_with_context.1} parent=5 // pred_fallthru
        _
      %p657 = scmp.le.s32.totalorder 1, %s37
      %p658 = scmp.lt.s32.totalorder %s37, 3
      %p659 = pnand %p657, %p658
      %p660 = pneg %p659
      // Predicated region
      $region85: #{mha_with_context.1} parent=5 // pred_check
        _
      $region86: #{mha_with_context.1} parent=5 // pred_check_branch
        %662 = sbr.rel (%p659) target = $region88
      $region87: #{mha_with_context.1} parent=5 // pred_region
        %s663 = ssub.s32 %s37, 1
        %s664 = sand.u32 %s50, 1
        %s665 = scalar_lea.sflag [#allocation4], %s664
        %s666 = sand.u32 %s50, 1
        %s667 = smul.addr %s666, 32
        %s668 = scalar_lea.vmem [#allocation3], %s667
        // Predicated region
        $region89: #{mha_with_context.1} parent=87 // pred_check
          %p669 = pneg %p63
        $region90: #{mha_with_context.1} parent=87 // pred_check_branch
          %671 = sbr.rel (%p669) target = $region92
        $region91: #{mha_with_context.1} parent=87 // pred_region
          %672 = dma.done %s665, 512
        $region92: #{mha_with_context.1} parent=87 // pred_fallthru
          _
        %s673 = sand.u32 %s42, 1
        %s674 = scalar_lea.sflag [#allocation7], %s673
        %s675 = sand.u32 %s76, 1
        %s676 = smul.addr %s675, 32
        %s677 = scalar_lea.vmem [#allocation6], %s676
        // Predicated region
        $region93: #{mha_with_context.1} parent=87 // pred_check
          %p678 = pneg %p89
        $region94: #{mha_with_context.1} parent=87 // pred_check_branch
          %680 = sbr.rel (%p678) target = $region96
        $region95: #{mha_with_context.1} parent=87 // pred_region
          %681 = dma.done %s674, 512
        $region96: #{mha_with_context.1} parent=87 // pred_fallthru
          _
        %s682 = sand.u32 %s42, 1
        %s683 = scalar_lea.sflag [#allocation7], %s682
        %s684 = sand.u32 %s102, 1
        %s685 = smul.addr %s684, 32
        %s686 = scalar_lea.vmem [#allocation8], %s685
        // Predicated region
        $region97: #{mha_with_context.1} parent=87 // pred_check
          %p687 = pneg %p115
        $region98: #{mha_with_context.1} parent=87 // pred_check_branch
          %689 = sbr.rel (%p687) target = $region100
        $region99: #{mha_with_context.1} parent=87 // pred_region
          %690 = dma.done %s683, 512
        $region100: #{mha_with_context.1} parent=87 // pred_fallthru
          _
        // Predicated region
        $region101: #{mha_with_context.1} parent=87 // pred_check
          %p691 = pneg %p162
        $region102: #{mha_with_context.1} parent=87 // pred_check_branch
          %693 = sbr.rel (%p691) target = $region104
        $region103: #{mha_with_context.1} parent=87 // pred_region
          %694 = dma.done [#allocation10], 512
        $region104: #{mha_with_context.1} parent=87 // pred_fallthru
          _
        // Predicated region
        $region105: #{mha_with_context.1} parent=87 // pred_check
          %p695 = pneg %p225
        $region106: #{mha_with_context.1} parent=87 // pred_check_branch
          %697 = sbr.rel (%p695) target = $region108
        $region107: #{mha_with_context.1} parent=87 // pred_region
          %698 = dma.done [#allocation10], 256
        $region108: #{mha_with_context.1} parent=87 // pred_fallthru
          _
        // Predicated region
        $region109: #{mha_with_context.1} parent=87 // pred_check
          %p699 = pneg %p246
        $region110: #{mha_with_context.1} parent=87 // pred_check_branch
          %701 = sbr.rel (%p699) target = $region112
        $region111: #{mha_with_context.1} parent=87 // pred_region
          %702 = dma.done [#allocation13], 16
        $region112: #{mha_with_context.1} parent=87 // pred_fallthru
          _
        // Predicated region
        $region113: #{mha_with_context.1} parent=87 // pred_check
          %p703 = pneg %p267
        $region114: #{mha_with_context.1} parent=87 // pred_check_branch
          %705 = sbr.rel (%p703) target = $region116
        $region115: #{mha_with_context.1} parent=87 // pred_region
          %706 = dma.done [#allocation13], 256
        $region116: #{mha_with_context.1} parent=87 // pred_fallthru
          _
        // Predicated region
        $region117: #{mha_with_context.1} parent=87 // pred_check
          %p707 = pneg %p309
        $region118: #{mha_with_context.1} parent=87 // pred_check_branch
          %709 = sbr.rel (%p707) target = $region120
        $region119: #{mha_with_context.1} parent=87 // pred_region
          %710 = dma.done [#allocation16], 256
        $region120: #{mha_with_context.1} parent=87 // pred_fallthru
          _
        // Predicated region
        $region121: #{mha_with_context.1} parent=87 // pred_check
          %p711 = pneg %p330
        $region122: #{mha_with_context.1} parent=87 // pred_check_branch
          %713 = sbr.rel (%p711) target = $region124
        $region123: #{mha_with_context.1} parent=87 // pred_region
          %714 = dma.done [#allocation16], 16
        $region124: #{mha_with_context.1} parent=87 // pred_fallthru
          _
        // Predicated region
        $region125: #{mha_with_context.1} parent=87 // pred_check
          %p715 = pneg %p351
        $region126: #{mha_with_context.1} parent=87 // pred_check_branch
          %717 = sbr.rel (%p715) target = $region128
        $region127: #{mha_with_context.1} parent=87 // pred_region
          %718 = dma.done [#allocation19], 256
        $region128: #{mha_with_context.1} parent=87 // pred_fallthru
          _
        // Predicated region
        $region129: #{mha_with_context.1} parent=87 // pred_check
          %p719 = pneg %p372
        $region130: #{mha_with_context.1} parent=87 // pred_check_branch
          %721 = sbr.rel (%p719) target = $region132
        $region131: #{mha_with_context.1} parent=87 // pred_region
          %722 = dma.done [#allocation19], 16
        $region132: #{mha_with_context.1} parent=87 // pred_fallthru
          _
        // Predicated region
        $region133: #{mha_with_context.1} parent=87 // pred_check
          %p723 = pneg %p393
        $region134: #{mha_with_context.1} parent=87 // pred_check_branch
          %725 = sbr.rel (%p723) target = $region136
        $region135: #{mha_with_context.1} parent=87 // pred_region
          %726 = dma.done [#allocation22], 16
        $region136: #{mha_with_context.1} parent=87 // pred_fallthru
          _
        // Predicated region
        $region137: #{mha_with_context.1} parent=87 // pred_check
          %p727 = pneg %p414
        $region138: #{mha_with_context.1} parent=87 // pred_check_branch
          %729 = sbr.rel (%p727) target = $region140
        $region139: #{mha_with_context.1} parent=87 // pred_region
          %730 = dma.done [#allocation22], 16
        $region140: #{mha_with_context.1} parent=87 // pred_fallthru
          _
        %s731 = sand.u32 %s50, 1
        %s732 = scalar_lea.sflag [#allocation4], %s731
        %s733 = sand.u32 %s50, 1
        %s734 = smul.addr %s733, 32
        %s735 = scalar_lea.vmem [#allocation3], %s734
        %p736 = pneg %p63
        %p737 = pneg %p60
        %s738 = sand.u32 %s42, 1
        %s739 = scalar_lea.sflag [#allocation7], %s738
        %s740 = sand.u32 %s76, 1
        %s741 = smul.addr %s740, 32
        %s742 = scalar_lea.vmem [#allocation6], %s741
        %p743 = pneg %p89
        %p744 = pneg %p86
        %s745 = sand.u32 %s42, 1
        %s746 = scalar_lea.sflag [#allocation7], %s745
        %s747 = sand.u32 %s102, 1
        %s748 = smul.addr %s747, 32
        %s749 = scalar_lea.vmem [#allocation8], %s748
        %p750 = pneg %p115
        %p751 = pneg %p112
        %p752 = scmp.lt.s32.totalorder %s42, 1
        %s753 = scalar_select %p752, %s42, 1
        %s754 = scalar_lea.vmem %s3, %s753
        %p755 = pneg %p141
        %p756 = pneg %p138
        %p757 = pneg %p162
        %p758 = pneg %p159
        %p759 = pneg %p183
        %p760 = pneg %p180
        %p761 = pneg %p204
        %p762 = pneg %p201
        %p763 = pneg %p225
        %p764 = pneg %p222
        %p765 = pneg %p246
        %p766 = pneg %p243
        %p767 = pneg %p267
        %p768 = pneg %p264
        %p769 = pneg %p288
        %p770 = pneg %p285
        %p771 = pneg %p309
        %p772 = pneg %p306
        %p773 = pneg %p330
        %p774 = pneg %p327
        %p775 = pneg %p351
        %p776 = pneg %p348
        %p777 = pneg %p372
        %p778 = pneg %p369
        %p779 = pneg %p393
        %p780 = pneg %p390
        %p781 = pneg %p414
        %p782 = pneg %p411
        %p783 = pneg %p440
        %p784 = pneg %p437
        %s785 = sand.u32 %s427, 1
        %s786 = scalar_lea.sflag [#allocation5], %s785
        %s787 = sand.u32 %s427, 1
        %s788 = smul.addr %s787, 32
        %s789 = scalar_lea.vmem [#allocation24], %s788
        %p790 = scmp.lt.s32.totalorder %s42, 1
        %s791 = scalar_select %p790, %s42, 1
        %s792 = scalar_lea.vmem %s3, %s791
        %v794 = vld [vmem:[#allocation9] sm:$0xff]
        %v795 = vld [vmem:[#allocation9 + $0x8] sm:$0xff]
        %v796 = vld [vmem:[#allocation9 + $0x10] sm:$0xff]
        %v797 = vld [vmem:[#allocation9 + $0x18] sm:$0xff]
        %vm798 = vcmp.eq.f32.partialorder %v794, 0.0
        %vm799 = vcmp.eq.f32.partialorder %v795, 0.0
        %vm800 = vcmp.eq.f32.partialorder %v796, 0.0
        %vm801 = vcmp.eq.f32.partialorder %v797, 0.0
        %v802 = vld [vmem:[%s668] sm:$0xff]
        %v803 = vld [vmem:[%s668 + $0x8] sm:$0xff]
        %v804 = vld [vmem:[%s668 + $0x10] sm:$0xff]
        %v805 = vld [vmem:[%s668 + $0x18] sm:$0xff]
        %v806 = vpack.c.bf16 %v803, %v802
        %v807 = vpack.c.bf16 %v805, %v804
        %v808 = vld [vmem:[%s5] sm:$0xf]
        %v809 = vld [vmem:[%s5 + $0x4] sm:$0xf]
        %v810 = vld [vmem:[%s5 + $0x8] sm:$0xf]
        %v811 = vld [vmem:[%s5 + $0xc] sm:$0xf]
        %v812 = vld [vmem:[%s6] sm:$0x1]
        %v814 = vlaneseq
        %v815 = vshrl.u32 %v814, 7
        %v816 = vsub.s32 0, %v815
        %v817 = vrot.slane %v812, %v816
        %v823 = vunpack.c.l.b16 %v808
        %v824 = vunpack.c.l.b16 %v809
        %v825 = vunpack.c.l.b16 %v810
        %v826 = vunpack.c.l.b16 %v811
        %v827 = vpack.c.b16 %v824, %v823
        %v828 = vpack.c.b16 %v826, %v825
        %vm831 = vcmask 261120
        %v833 = vsel %vm831, %v806, 0
        %v836 = vsel %vm831, %v807, 0
        %838 = vmatprep.subr.bf16.mxu0 0
        %839 = vmatpush1.bf16.msra.mxu0 0
        %840 = vmatprep.subr.bf16.mxu0 0
        %841 = vmatpush1.bf16.msra.mxu0 0
        %842 = vmatprep.subr.bf16.mxu0 0
        %843 = vmatpush1.bf16.msra.mxu0 0
        %844 = vmatprep.subr.bf16.mxu0 0
        %845 = vmatpush1.bf16.msra.mxu0 0
        %846 = vmatprep.subr.bf16.mxu0 0
        %847 = vmatpush1.bf16.msra.mxu0 0
        %848 = vmatprep.subr.bf16.mxu0 0
        %849 = vmatpush1.bf16.msra.mxu0 0
        %850 = vmatprep.subr.bf16.mxu0 0
        %851 = vmatpush1.bf16.msra.mxu0 %v828
        %852 = vmatprep.subr.bf16.mxu0 0
        %853 = vmatpush1.bf16.msra.mxu0 %v827
        %854 = vmatprep.subr.bf16.mxu0 0
        %855 = vmatpush2.bf16.msra.mxu0 0
        %856 = vmatprep.subr.bf16.mxu0 0
        %857 = vmatpush2.bf16.msra.mxu0 0
        %858 = vmatprep.subr.bf16.mxu0 0
        %859 = vmatpush2.bf16.msra.mxu0 0
        %860 = vmatprep.subr.bf16.mxu0 0
        %861 = vmatpush2.bf16.msra.mxu0 0
        %862 = vmatprep.subr.bf16.mxu0 0
        %863 = vmatpush2.bf16.msra.mxu0 0
        %864 = vmatprep.subr.bf16.mxu0 0
        %865 = vmatpush2.bf16.msra.mxu0 0
        %866 = vmatprep.subr.bf16.mxu0 0
        %867 = vmatpush2.bf16.msra.mxu0 0
        %868 = vmatprep.subr.bf16.mxu0 0
        %869 = vmatpush2.bf16.msra.mxu0 0
        %870 = vmatprep.mubr.bf16.mxu0 0
        %871 = vmatmul.mubr.bf16.gmra.mxu0 %v833
        %v872 = vpop.f32.mrf.mxu0
        %v873 = vadd.f32 %v817, %v872
        %v874 = vpop.f32.mrf.mxu0
        %v875 = vpop.f32.mrf.mxu0
        %v876 = vadd.f32 %v817, %v875
        %v877 = vpop.f32.mrf.mxu0
        %878 = vmatprep.mubr.bf16.mxu0 0
        %879 = vmatmul.mubr.bf16.gmra.mxu0 %v836
        %v880 = vpop.f32.mrf.mxu0
        %v881 = vadd.f32 %v817, %v880
        %v882 = vpop.f32.mrf.mxu0
        %v883 = vpop.f32.mrf.mxu0
        %v884 = vadd.f32 %v817, %v883
        %v885 = vpop.f32.mrf.mxu0
        %886 = vdwg.mxu0
        %v887 = vmul.f32 %v873, 0.35355338
        %v888 = vmul.f32 %v876, 0.35355338
        %v889 = vmul.f32 %v881, 0.35355338
        %v890 = vmul.f32 %v884, 0.35355338
        %v891 = vld [vmem:[%s677] sm:$0xff]
        %v892 = vld [vmem:[%s677 + $0x8] sm:$0xff]
        %v893 = vld [vmem:[%s677 + $0x10] sm:$0xff]
        %v894 = vld [vmem:[%s677 + $0x18] sm:$0xff]
        %v895 = vpack.c.bf16 %v892, %v891
        %v896 = vpack.c.bf16 %v894, %v893
        %v897 = vld [vmem:[#allocation11] sm:$0xf]
        %v898 = vld [vmem:[#allocation11 + $0x4] sm:$0xf]
        %v899 = vld [vmem:[#allocation11 + $0x8] sm:$0xf]
        %v900 = vld [vmem:[#allocation11 + $0xc] sm:$0xf]
        %v901 = vld [vmem:[#allocation12] sm:$0x1]
        %v903 = vlaneseq
        %v904 = vshrl.u32 %v903, 7
        %v905 = vsub.s32 0, %v904
        %v906 = vrot.slane %v901, %v905
        %v912 = vunpack.c.l.b16 %v897
        %v913 = vunpack.c.l.b16 %v898
        %v914 = vunpack.c.l.b16 %v899
        %v915 = vunpack.c.l.b16 %v900
        %v916 = vpack.c.b16 %v913, %v912
        %v917 = vpack.c.b16 %v915, %v914
        %v921 = vsel %vm831, %v895, 0
        %v924 = vsel %vm831, %v896, 0
        %926 = vmatprep.subr.bf16.mxu0 0
        %927 = vmatpush1.bf16.msra.mxu0 0
        %928 = vmatprep.subr.bf16.mxu0 0
        %929 = vmatpush1.bf16.msra.mxu0 0
        %930 = vmatprep.subr.bf16.mxu0 0
        %931 = vmatpush1.bf16.msra.mxu0 0
        %932 = vmatprep.subr.bf16.mxu0 0
        %933 = vmatpush1.bf16.msra.mxu0 0
        %934 = vmatprep.subr.bf16.mxu0 0
        %935 = vmatpush1.bf16.msra.mxu0 0
        %936 = vmatprep.subr.bf16.mxu0 0
        %937 = vmatpush1.bf16.msra.mxu0 0
        %938 = vmatprep.subr.bf16.mxu0 0
        %939 = vmatpush1.bf16.msra.mxu0 %v917
        %940 = vmatprep.subr.bf16.mxu0 0
        %941 = vmatpush1.bf16.msra.mxu0 %v916
        %942 = vmatprep.subr.bf16.mxu0 0
        %943 = vmatpush2.bf16.msra.mxu0 0
        %944 = vmatprep.subr.bf16.mxu0 0
        %945 = vmatpush2.bf16.msra.mxu0 0
        %946 = vmatprep.subr.bf16.mxu0 0
        %947 = vmatpush2.bf16.msra.mxu0 0
        %948 = vmatprep.subr.bf16.mxu0 0
        %949 = vmatpush2.bf16.msra.mxu0 0
        %950 = vmatprep.subr.bf16.mxu0 0
        %951 = vmatpush2.bf16.msra.mxu0 0
        %952 = vmatprep.subr.bf16.mxu0 0
        %953 = vmatpush2.bf16.msra.mxu0 0
        %954 = vmatprep.subr.bf16.mxu0 0
        %955 = vmatpush2.bf16.msra.mxu0 0
        %956 = vmatprep.subr.bf16.mxu0 0
        %957 = vmatpush2.bf16.msra.mxu0 0
        %958 = vmatprep.mubr.bf16.mxu0 0
        %959 = vmatmul.mubr.bf16.gmra.mxu0 %v921
        %v960 = vpop.f32.mrf.mxu0
        %v961 = vadd.f32 %v906, %v960
        %v962 = vpop.f32.mrf.mxu0
        %v963 = vpop.f32.mrf.mxu0
        %v964 = vadd.f32 %v906, %v963
        %v965 = vpop.f32.mrf.mxu0
        %966 = vmatprep.mubr.bf16.mxu0 0
        %967 = vmatmul.mubr.bf16.gmra.mxu0 %v924
        %v968 = vpop.f32.mrf.mxu0
        %v969 = vadd.f32 %v906, %v968
        %v970 = vpop.f32.mrf.mxu0
        %v971 = vpop.f32.mrf.mxu0
        %v972 = vadd.f32 %v906, %v971
        %v973 = vpop.f32.mrf.mxu0
        %974 = vdwg.mxu0
        %v975 = vld [vmem:[%s686] sm:$0xff]
        %v976 = vld [vmem:[%s686 + $0x8] sm:$0xff]
        %v977 = vld [vmem:[%s686 + $0x10] sm:$0xff]
        %v978 = vld [vmem:[%s686 + $0x18] sm:$0xff]
        %v979 = vpack.c.bf16 %v976, %v975
        %v980 = vpack.c.bf16 %v978, %v977
        %v981 = vld [vmem:[#allocation14] sm:$0xf]
        %v982 = vld [vmem:[#allocation14 + $0x4] sm:$0xf]
        %v983 = vld [vmem:[#allocation14 + $0x8] sm:$0xf]
        %v984 = vld [vmem:[#allocation14 + $0xc] sm:$0xf]
        %v985 = vld [vmem:[%s10] sm:$0x1]
        %v987 = vlaneseq
        %v988 = vshrl.u32 %v987, 7
        %v989 = vsub.s32 0, %v988
        %v990 = vrot.slane %v985, %v989
        %v996 = vunpack.c.l.b16 %v981
        %v997 = vunpack.c.l.b16 %v982
        %v998 = vunpack.c.l.b16 %v983
        %v999 = vunpack.c.l.b16 %v984
        %v1000 = vpack.c.b16 %v997, %v996
        %v1001 = vpack.c.b16 %v999, %v998
        %v1005 = vsel %vm831, %v979, 0
        %v1008 = vsel %vm831, %v980, 0
        %1010 = vmatprep.subr.bf16.mxu0 0
        %1011 = vmatpush1.bf16.msra.mxu0 0
        %1012 = vmatprep.subr.bf16.mxu0 0
        %1013 = vmatpush1.bf16.msra.mxu0 0
        %1014 = vmatprep.subr.bf16.mxu0 0
        %1015 = vmatpush1.bf16.msra.mxu0 0
        %1016 = vmatprep.subr.bf16.mxu0 0
        %1017 = vmatpush1.bf16.msra.mxu0 0
        %1018 = vmatprep.subr.bf16.mxu0 0
        %1019 = vmatpush1.bf16.msra.mxu0 0
        %1020 = vmatprep.subr.bf16.mxu0 0
        %1021 = vmatpush1.bf16.msra.mxu0 0
        %1022 = vmatprep.subr.bf16.mxu0 0
        %1023 = vmatpush1.bf16.msra.mxu0 %v1001
        %1024 = vmatprep.subr.bf16.mxu0 0
        %1025 = vmatpush1.bf16.msra.mxu0 %v1000
        %1026 = vmatprep.subr.bf16.mxu0 0
        %1027 = vmatpush2.bf16.msra.mxu0 0
        %1028 = vmatprep.subr.bf16.mxu0 0
        %1029 = vmatpush2.bf16.msra.mxu0 0
        %1030 = vmatprep.subr.bf16.mxu0 0
        %1031 = vmatpush2.bf16.msra.mxu0 0
        %1032 = vmatprep.subr.bf16.mxu0 0
        %1033 = vmatpush2.bf16.msra.mxu0 0
        %1034 = vmatprep.subr.bf16.mxu0 0
        %1035 = vmatpush2.bf16.msra.mxu0 0
        %1036 = vmatprep.subr.bf16.mxu0 0
        %1037 = vmatpush2.bf16.msra.mxu0 0
        %1038 = vmatprep.subr.bf16.mxu0 0
        %1039 = vmatpush2.bf16.msra.mxu0 0
        %1040 = vmatprep.subr.bf16.mxu0 0
        %1041 = vmatpush2.bf16.msra.mxu0 0
        %1042 = vmatprep.mubr.bf16.mxu0 0
        %1043 = vmatmul.mubr.bf16.gmra.mxu0 %v1005
        %v1044 = vpop.f32.mrf.mxu0
        %v1045 = vadd.f32 %v990, %v1044
        %v1046 = vpop.f32.mrf.mxu0
        %v1047 = vpop.f32.mrf.mxu0
        %v1048 = vadd.f32 %v990, %v1047
        %v1049 = vpop.f32.mrf.mxu0
        %1050 = vmatprep.mubr.bf16.mxu0 0
        %1051 = vmatmul.mubr.bf16.gmra.mxu0 %v1008
        %v1052 = vpop.f32.mrf.mxu0
        %v1053 = vadd.f32 %v990, %v1052
        %v1054 = vpop.f32.mrf.mxu0
        %v1055 = vpop.f32.mrf.mxu0
        %v1056 = vadd.f32 %v990, %v1055
        %v1057 = vpop.f32.mrf.mxu0
        %1058 = vdwg.mxu0
        %v1059 = vld [vmem:[%s792] sm:$0x1]
        %v1060 = vpack.c.bf16 %v1059, %v1059
        %v1061 = vld [vmem:[#allocation15] sm:$0xf]
        %v1062 = vld [vmem:[#allocation15 + $0x4] sm:$0xf]
        %v1063 = vld [vmem:[#allocation15 + $0x8] sm:$0xf]
        %v1064 = vld [vmem:[#allocation15 + $0xc] sm:$0xf]
        %v1065 = vld [vmem:[#allocation17] sm:$0x1]
        %v1070 = vunpack.c.l.b16 %v1061
        %v1071 = vunpack.c.l.b16 %v1062
        %v1072 = vunpack.c.l.b16 %v1063
        %v1073 = vunpack.c.l.b16 %v1064
        %v1074 = vpack.c.b16 %v1071, %v1070
        %v1075 = vpack.c.b16 %v1073, %v1072
        %v1079 = vsel %vm831, %v1060, 0
        %1081 = vmatprep.subr.bf16.mxu0 0
        %1082 = vmatpush1.bf16.msra.mxu0 0
        %1083 = vmatprep.subr.bf16.mxu0 0
        %1084 = vmatpush1.bf16.msra.mxu0 0
        %1085 = vmatprep.subr.bf16.mxu0 0
        %1086 = vmatpush1.bf16.msra.mxu0 0
        %1087 = vmatprep.subr.bf16.mxu0 0
        %1088 = vmatpush1.bf16.msra.mxu0 0
        %1089 = vmatprep.subr.bf16.mxu0 0
        %1090 = vmatpush1.bf16.msra.mxu0 0
        %1091 = vmatprep.subr.bf16.mxu0 0
        %1092 = vmatpush1.bf16.msra.mxu0 0
        %1093 = vmatprep.subr.bf16.mxu0 0
        %1094 = vmatpush1.bf16.msra.mxu0 %v1075
        %1095 = vmatprep.subr.bf16.mxu0 0
        %1096 = vmatpush1.bf16.msra.mxu0 %v1074
        %1097 = vmatprep.subr.bf16.mxu0 0
        %1098 = vmatpush2.bf16.msra.mxu0 0
        %1099 = vmatprep.subr.bf16.mxu0 0
        %1100 = vmatpush2.bf16.msra.mxu0 0
        %1101 = vmatprep.subr.bf16.mxu0 0
        %1102 = vmatpush2.bf16.msra.mxu0 0
        %1103 = vmatprep.subr.bf16.mxu0 0
        %1104 = vmatpush2.bf16.msra.mxu0 0
        %1105 = vmatprep.subr.bf16.mxu0 0
        %1106 = vmatpush2.bf16.msra.mxu0 0
        %1107 = vmatprep.subr.bf16.mxu0 0
        %1108 = vmatpush2.bf16.msra.mxu0 0
        %1109 = vmatprep.subr.bf16.mxu0 0
        %1110 = vmatpush2.bf16.msra.mxu0 0
        %1111 = vmatprep.subr.bf16.mxu0 0
        %1112 = vmatpush2.bf16.msra.mxu0 0
        %1113 = vmatprep.mubr.bf16.mxu0 0
        %1114 = vmatmul.mubr.bf16.gmra.mxu0 %v1079
        %v1115 = vpop.f32.mrf.mxu0
        %v1116 = vadd.f32 %v1065, %v1115
        %v1117 = vpop.f32.mrf.mxu0
        %v1118 = vpop.f32.mrf.mxu0
        %v1119 = vpop.f32.mrf.mxu0
        %1120 = vdwg.mxu0
        %v1121 = vlaneseq
        %v1122 = vshrl.u32 %v1121, 7
        %v1123 = vsub.s32 0, %v1122
        %v1124 = vrot.slane %v1116, %v1123
        %v1125 = vadd.f32 %v961, %v1124
        %v1126 = vadd.f32 %v964, %v1124
        %v1127 = vadd.f32 %v969, %v1124
        %v1128 = vadd.f32 %v972, %v1124
        %v1129 = vpack.c.bf16 %v888, %v887
        %v1130 = vpack.c.bf16 %v890, %v889
        %v1131 = vpack.c.bf16 %v1126, %v1125
        %v1132 = vpack.c.bf16 %v1128, %v1127
        %v1133 = vpack.c.bf16 %v1048, %v1045
        %v1134 = vpack.c.bf16 %v1056, %v1053
        %vm1135 = vcmask 64512
        %v1137 = vsel %vm1135, %v1129, 0
        %v1140 = vsel %vm1135, %v1130, 0
        %v1143 = vsel %vm1135, %v1131, 0
        %v1146 = vsel %vm1135, %v1132, 0
        %1148 = vmatprep.subr.bf16.mxu0 0
        %1149 = vmatpush1.bf16.xpose.msra.mxu0 0
        %1150 = vmatprep.subr.bf16.mxu0 0
        %1151 = vmatpush1.bf16.xpose.msra.mxu0 0
        %1152 = vmatprep.subr.bf16.mxu0 0
        %1153 = vmatpush1.bf16.xpose.msra.mxu0 0
        %1154 = vmatprep.subr.bf16.mxu0 0
        %1155 = vmatpush1.bf16.xpose.msra.mxu0 0
        %1156 = vmatprep.subr.bf16.mxu0 0
        %1157 = vmatpush1.bf16.xpose.msra.mxu0 0
        %1158 = vmatprep.subr.bf16.mxu0 0
        %1159 = vmatpush1.bf16.xpose.msra.mxu0 0
        %1160 = vmatprep.subr.bf16.mxu0 0
        %1161 = vmatpush1.bf16.xpose.msra.mxu0 %v1146
        %1162 = vmatprep.subr.bf16.mxu0 0
        %1163 = vmatpush1.bf16.xpose.msra.mxu0 %v1143
        %1164 = vmatprep.subr.bf16.mxu0 0
        %1165 = vmatpush2.bf16.xpose.msra.mxu0 0
        %1166 = vmatprep.subr.bf16.mxu0 0
        %1167 = vmatpush2.bf16.xpose.msra.mxu0 0
        %1168 = vmatprep.subr.bf16.mxu0 0
        %1169 = vmatpush2.bf16.xpose.msra.mxu0 0
        %1170 = vmatprep.subr.bf16.mxu0 0
        %1171 = vmatpush2.bf16.xpose.msra.mxu0 0
        %1172 = vmatprep.subr.bf16.mxu0 0
        %1173 = vmatpush2.bf16.xpose.msra.mxu0 0
        %1174 = vmatprep.subr.bf16.mxu0 0
        %1175 = vmatpush2.bf16.xpose.msra.mxu0 0
        %1176 = vmatprep.subr.bf16.mxu0 0
        %1177 = vmatpush2.bf16.xpose.msra.mxu0 0
        %1178 = vmatprep.subr.bf16.mxu0 0
        %1179 = vmatpush2.bf16.xpose.msra.mxu0 0
        %1180 = vmatprep.mubr.bf16.mxu0 0
        %1181 = vmatmul.mubr.bf16.gmra.mxu0 %v1137
        %v1182 = vpop.f32.mrf.mxu0
        %v1183 = vadd.f32 0.0, %v1182
        %v1184 = vpop.f32.mrf.mxu0
        %v1185 = vpop.f32.mrf.mxu0
        %v1186 = vadd.f32 0.0, %v1185
        %v1187 = vpop.f32.mrf.mxu0
        %1188 = vmatprep.mubr.bf16.mxu0 0
        %1189 = vmatmul.mubr.bf16.gmra.mxu0 %v1140
        %v1190 = vpop.f32.mrf.mxu0
        %v1191 = vadd.f32 0.0, %v1190
        %v1192 = vpop.f32.mrf.mxu0
        %v1193 = vpop.f32.mrf.mxu0
        %v1194 = vadd.f32 0.0, %v1193
        %v1195 = vpop.f32.mrf.mxu0
        %1196 = vdwg.mxu0
        %v1197 = vsel %vm798, -1e+09, %v1183
        %v1198 = vsel %vm799, -1e+09, %v1186
        %v1199 = vsel %vm800, -1e+09, %v1191
        %v1200 = vsel %vm801, -1e+09, %v1194
        %v1201 = vsel %vm831, %v1197, -inf
        %1202 = vmax.xlane.f32.xlu0 %v1201
        %v1203 = vpop.xlane.xlu0 %1202
        %v1204 = vsel %vm831, %v1198, -inf
        %1205 = vmax.xlane.f32.xlu0 %v1204
        %v1206 = vpop.xlane.xlu0 %1205
        %v1207 = vsel %vm831, %v1199, -inf
        %1208 = vmax.xlane.f32.xlu0 %v1207
        %v1209 = vpop.xlane.xlu0 %1208
        %v1210 = vsel %vm831, %v1200, -inf
        %1211 = vmax.xlane.f32.xlu0 %v1210
        %v1212 = vpop.xlane.xlu0 %1211
        %v1213 = vsub.f32 %v1197, %v1203
        %v1214 = vsub.f32 %v1198, %v1206
        %v1215 = vsub.f32 %v1199, %v1209
        %v1216 = vsub.f32 %v1200, %v1212
        %v1217 = vmul.f32 %v1213, 1.442695
        %v1218 = vpow.pop %v1217
        %v1219 = vmul.f32 %v1214, 1.442695
        %v1220 = vpow.pop %v1219
        %v1221 = vmul.f32 %v1215, 1.442695
        %v1222 = vpow.pop %v1221
        %v1223 = vmul.f32 %v1216, 1.442695
        %v1224 = vpow.pop %v1223
        %v1225 = vsel %vm831, %v1218, 0.0
        %1226 = vadd.xlane.f32.xlu0 %v1225
        %v1227 = vpop.xlane.xlu0 %1226
        %v1228 = vsel %vm831, %v1220, 0.0
        %1229 = vadd.xlane.f32.xlu0 %v1228
        %v1230 = vpop.xlane.xlu0 %1229
        %v1231 = vsel %vm831, %v1222, 0.0
        %1232 = vadd.xlane.f32.xlu0 %v1231
        %v1233 = vpop.xlane.xlu0 %1232
        %v1234 = vsel %vm831, %v1224, 0.0
        %1235 = vadd.xlane.f32.xlu0 %v1234
        %v1236 = vpop.xlane.xlu0 %1235
        %v1237 = vrcp.pop %v1227
        %v1238 = vrcp.pop %v1230
        %v1239 = vrcp.pop %v1233
        %v1240 = vrcp.pop %v1236
        %v1241 = vmul.f32 %v1218, %v1237
        %v1242 = vmul.f32 %v1220, %v1238
        %v1243 = vmul.f32 %v1222, %v1239
        %v1244 = vmul.f32 %v1224, %v1240
        %v1245 = vpack.c.bf16 %v1242, %v1241
        %v1246 = vpack.c.bf16 %v1244, %v1243
        %v1248 = vsel %vm831, %v1245, 0
        %v1251 = vsel %vm831, %v1246, 0
        %1253 = vmatprep.subr.bf16.mxu0 0
        %1254 = vmatpush1.bf16.msra.mxu0 0
        %1255 = vmatprep.subr.bf16.mxu0 0
        %1256 = vmatpush1.bf16.msra.mxu0 0
        %1257 = vmatprep.subr.bf16.mxu0 0
        %1258 = vmatpush1.bf16.msra.mxu0 0
        %1259 = vmatprep.subr.bf16.mxu0 0
        %1260 = vmatpush1.bf16.msra.mxu0 0
        %1261 = vmatprep.subr.bf16.mxu0 0
        %1262 = vmatpush1.bf16.msra.mxu0 0
        %1263 = vmatprep.subr.bf16.mxu0 0
        %1264 = vmatpush1.bf16.msra.mxu0 0
        %1265 = vmatprep.subr.bf16.mxu0 0
        %1266 = vmatpush1.bf16.msra.mxu0 %v1134
        %1267 = vmatprep.subr.bf16.mxu0 0
        %1268 = vmatpush1.bf16.msra.mxu0 %v1133
        %1269 = vmatprep.subr.bf16.mxu0 0
        %1270 = vmatpush2.bf16.msra.mxu0 0
        %1271 = vmatprep.subr.bf16.mxu0 0
        %1272 = vmatpush2.bf16.msra.mxu0 0
        %1273 = vmatprep.subr.bf16.mxu0 0
        %1274 = vmatpush2.bf16.msra.mxu0 0
        %1275 = vmatprep.subr.bf16.mxu0 0
        %1276 = vmatpush2.bf16.msra.mxu0 0
        %1277 = vmatprep.subr.bf16.mxu0 0
        %1278 = vmatpush2.bf16.msra.mxu0 0
        %1279 = vmatprep.subr.bf16.mxu0 0
        %1280 = vmatpush2.bf16.msra.mxu0 0
        %1281 = vmatprep.subr.bf16.mxu0 0
        %1282 = vmatpush2.bf16.msra.mxu0 0
        %1283 = vmatprep.subr.bf16.mxu0 0
        %1284 = vmatpush2.bf16.msra.mxu0 0
        %1285 = vmatprep.mubr.bf16.mxu0 0
        %1286 = vmatmul.mubr.bf16.gmra.mxu0 %v1248
        %v1287 = vpop.f32.mrf.mxu0
        %v1288 = vadd.f32 0.0, %v1287
        %v1289 = vpop.f32.mrf.mxu0
        %v1290 = vpop.f32.mrf.mxu0
        %v1291 = vadd.f32 0.0, %v1290
        %v1292 = vpop.f32.mrf.mxu0
        %1293 = vmatprep.mubr.bf16.mxu0 0
        %1294 = vmatmul.mubr.bf16.gmra.mxu0 %v1251
        %v1295 = vpop.f32.mrf.mxu0
        %v1296 = vadd.f32 0.0, %v1295
        %v1297 = vpop.f32.mrf.mxu0
        %v1298 = vpop.f32.mrf.mxu0
        %v1299 = vadd.f32 0.0, %v1298
        %v1300 = vpop.f32.mrf.mxu0
        %1301 = vdwg.mxu0
        %1302 = vst.msk [vmem:[#allocation2] sm:$0xff] %vm1135, %v1288
        %1303 = vst.msk [vmem:[#allocation2 + $0x8] sm:$0xff] %vm1135, %v1291
        %1304 = vst.msk [vmem:[#allocation2 + $0x10] sm:$0xff] %vm1135, %v1296
        %1305 = vst.msk [vmem:[#allocation2 + $0x18] sm:$0xff] %vm1135, %v1299
        %1308 = vrot.lane.b32.xlu0 %v1129, 120
        %v1309 = vpop.permute.xlu0 %1308
        %1310 = vrot.lane.b32.xlu0 %v1130, 120
        %v1311 = vpop.permute.xlu0 %1310
        %1314 = vrot.lane.b32.xlu0 %v1131, 120
        %v1315 = vpop.permute.xlu0 %1314
        %1316 = vrot.lane.b32.xlu0 %v1132, 120
        %v1317 = vpop.permute.xlu0 %1316
        %v1319 = vsel %vm1135, %v1309, 0
        %v1322 = vsel %vm1135, %v1311, 0
        %v1325 = vsel %vm1135, %v1315, 0
        %v1328 = vsel %vm1135, %v1317, 0
        %1330 = vmatprep.subr.bf16.mxu0 0
        %1331 = vmatpush1.bf16.xpose.msra.mxu0 0
        %1332 = vmatprep.subr.bf16.mxu0 0
        %1333 = vmatpush1.bf16.xpose.msra.mxu0 0
        %1334 = vmatprep.subr.bf16.mxu0 0
        %1335 = vmatpush1.bf16.xpose.msra.mxu0 0
        %1336 = vmatprep.subr.bf16.mxu0 0
        %1337 = vmatpush1.bf16.xpose.msra.mxu0 0
        %1338 = vmatprep.subr.bf16.mxu0 0
        %1339 = vmatpush1.bf16.xpose.msra.mxu0 0
        %1340 = vmatprep.subr.bf16.mxu0 0
        %1341 = vmatpush1.bf16.xpose.msra.mxu0 0
        %1342 = vmatprep.subr.bf16.mxu0 0
        %1343 = vmatpush1.bf16.xpose.msra.mxu0 %v1328
        %1344 = vmatprep.subr.bf16.mxu0 0
        %1345 = vmatpush1.bf16.xpose.msra.mxu0 %v1325
        %1346 = vmatprep.subr.bf16.mxu0 0
        %1347 = vmatpush2.bf16.xpose.msra.mxu0 0
        %1348 = vmatprep.subr.bf16.mxu0 0
        %1349 = vmatpush2.bf16.xpose.msra.mxu0 0
        %1350 = vmatprep.subr.bf16.mxu0 0
        %1351 = vmatpush2.bf16.xpose.msra.mxu0 0
        %1352 = vmatprep.subr.bf16.mxu0 0
        %1353 = vmatpush2.bf16.xpose.msra.mxu0 0
        %1354 = vmatprep.subr.bf16.mxu0 0
        %1355 = vmatpush2.bf16.xpose.msra.mxu0 0
        %1356 = vmatprep.subr.bf16.mxu0 0
        %1357 = vmatpush2.bf16.xpose.msra.mxu0 0
        %1358 = vmatprep.subr.bf16.mxu0 0
        %1359 = vmatpush2.bf16.xpose.msra.mxu0 0
        %1360 = vmatprep.subr.bf16.mxu0 0
        %1361 = vmatpush2.bf16.xpose.msra.mxu0 0
        %1362 = vmatprep.mubr.bf16.mxu0 0
        %1363 = vmatmul.mubr.bf16.gmra.mxu0 %v1319
        %v1364 = vpop.f32.mrf.mxu0
        %v1365 = vadd.f32 0.0, %v1364
        %v1366 = vpop.f32.mrf.mxu0
        %v1367 = vpop.f32.mrf.mxu0
        %v1368 = vadd.f32 0.0, %v1367
        %v1369 = vpop.f32.mrf.mxu0
        %1370 = vmatprep.mubr.bf16.mxu0 0
        %1371 = vmatmul.mubr.bf16.gmra.mxu0 %v1322
        %v1372 = vpop.f32.mrf.mxu0
        %v1373 = vadd.f32 0.0, %v1372
        %v1374 = vpop.f32.mrf.mxu0
        %v1375 = vpop.f32.mrf.mxu0
        %v1376 = vadd.f32 0.0, %v1375
        %v1377 = vpop.f32.mrf.mxu0
        %1378 = vdwg.mxu0
        %v1379 = vsel %vm798, -1e+09, %v1365
        %v1380 = vsel %vm799, -1e+09, %v1368
        %v1381 = vsel %vm800, -1e+09, %v1373
        %v1382 = vsel %vm801, -1e+09, %v1376
        %v1383 = vsel %vm831, %v1379, -inf
        %1384 = vmax.xlane.f32.xlu0 %v1383
        %v1385 = vpop.xlane.xlu0 %1384
        %v1386 = vsel %vm831, %v1380, -inf
        %1387 = vmax.xlane.f32.xlu0 %v1386
        %v1388 = vpop.xlane.xlu0 %1387
        %v1389 = vsel %vm831, %v1381, -inf
        %1390 = vmax.xlane.f32.xlu0 %v1389
        %v1391 = vpop.xlane.xlu0 %1390
        %v1392 = vsel %vm831, %v1382, -inf
        %1393 = vmax.xlane.f32.xlu0 %v1392
        %v1394 = vpop.xlane.xlu0 %1393
        %v1395 = vsub.f32 %v1379, %v1385
        %v1396 = vsub.f32 %v1380, %v1388
        %v1397 = vsub.f32 %v1381, %v1391
        %v1398 = vsub.f32 %v1382, %v1394
        %v1399 = vmul.f32 %v1395, 1.442695
        %v1400 = vpow.pop %v1399
        %v1401 = vmul.f32 %v1396, 1.442695
        %v1402 = vpow.pop %v1401
        %v1403 = vmul.f32 %v1397, 1.442695
        %v1404 = vpow.pop %v1403
        %v1405 = vmul.f32 %v1398, 1.442695
        %v1406 = vpow.pop %v1405
        %v1407 = vsel %vm831, %v1400, 0.0
        %1408 = vadd.xlane.f32.xlu0 %v1407
        %v1409 = vpop.xlane.xlu0 %1408
        %v1410 = vsel %vm831, %v1402, 0.0
        %1411 = vadd.xlane.f32.xlu0 %v1410
        %v1412 = vpop.xlane.xlu0 %1411
        %v1413 = vsel %vm831, %v1404, 0.0
        %1414 = vadd.xlane.f32.xlu0 %v1413
        %v1415 = vpop.xlane.xlu0 %1414
        %v1416 = vsel %vm831, %v1406, 0.0
        %1417 = vadd.xlane.f32.xlu0 %v1416
        %v1418 = vpop.xlane.xlu0 %1417
        %v1419 = vrcp.pop %v1409
        %v1420 = vrcp.pop %v1412
        %v1421 = vrcp.pop %v1415
        %v1422 = vrcp.pop %v1418
        %v1423 = vmul.f32 %v1400, %v1419
        %v1424 = vmul.f32 %v1402, %v1420
        %v1425 = vmul.f32 %v1404, %v1421
        %v1426 = vmul.f32 %v1406, %v1422
        %v1427 = vpack.c.bf16 %v1424, %v1423
        %v1428 = vpack.c.bf16 %v1426, %v1425
        %1431 = vrot.lane.b32.xlu0 %v1133, 120
        %v1432 = vpop.permute.xlu0 %1431
        %1433 = vrot.lane.b32.xlu0 %v1134, 120
        %v1434 = vpop.permute.xlu0 %1433
        %v1438 = vsel %vm831, %v1427, 0
        %v1441 = vsel %vm831, %v1428, 0
        %1443 = vmatprep.subr.bf16.mxu0 0
        %1444 = vmatpush1.bf16.msra.mxu0 0
        %1445 = vmatprep.subr.bf16.mxu0 0
        %1446 = vmatpush1.bf16.msra.mxu0 0
        %1447 = vmatprep.subr.bf16.mxu0 0
        %1448 = vmatpush1.bf16.msra.mxu0 0
        %1449 = vmatprep.subr.bf16.mxu0 0
        %1450 = vmatpush1.bf16.msra.mxu0 0
        %1451 = vmatprep.subr.bf16.mxu0 0
        %1452 = vmatpush1.bf16.msra.mxu0 0
        %1453 = vmatprep.subr.bf16.mxu0 0
        %1454 = vmatpush1.bf16.msra.mxu0 0
        %1455 = vmatprep.subr.bf16.mxu0 0
        %1456 = vmatpush1.bf16.msra.mxu0 %v1434
        %1457 = vmatprep.subr.bf16.mxu0 0
        %1458 = vmatpush1.bf16.msra.mxu0 %v1432
        %1459 = vmatprep.subr.bf16.mxu0 0
        %1460 = vmatpush2.bf16.msra.mxu0 0
        %1461 = vmatprep.subr.bf16.mxu0 0
        %1462 = vmatpush2.bf16.msra.mxu0 0
        %1463 = vmatprep.subr.bf16.mxu0 0
        %1464 = vmatpush2.bf16.msra.mxu0 0
        %1465 = vmatprep.subr.bf16.mxu0 0
        %1466 = vmatpush2.bf16.msra.mxu0 0
        %1467 = vmatprep.subr.bf16.mxu0 0
        %1468 = vmatpush2.bf16.msra.mxu0 0
        %1469 = vmatprep.subr.bf16.mxu0 0
        %1470 = vmatpush2.bf16.msra.mxu0 0
        %1471 = vmatprep.subr.bf16.mxu0 0
        %1472 = vmatpush2.bf16.msra.mxu0 0
        %1473 = vmatprep.subr.bf16.mxu0 0
        %1474 = vmatpush2.bf16.msra.mxu0 0
        %1475 = vmatprep.mubr.bf16.mxu0 0
        %1476 = vmatmul.mubr.bf16.gmra.mxu0 %v1438
        %v1477 = vpop.f32.mrf.mxu0
        %v1478 = vadd.f32 0.0, %v1477
        %v1479 = vpop.f32.mrf.mxu0
        %v1480 = vpop.f32.mrf.mxu0
        %v1481 = vadd.f32 0.0, %v1480
        %v1482 = vpop.f32.mrf.mxu0
        %1483 = vmatprep.mubr.bf16.mxu0 0
        %1484 = vmatmul.mubr.bf16.gmra.mxu0 %v1441
        %v1485 = vpop.f32.mrf.mxu0
        %v1486 = vadd.f32 0.0, %v1485
        %v1487 = vpop.f32.mrf.mxu0
        %v1488 = vpop.f32.mrf.mxu0
        %v1489 = vadd.f32 0.0, %v1488
        %v1490 = vpop.f32.mrf.mxu0
        %1491 = vdwg.mxu0
        %1496 = vrot.lane.b32.xlu0 %v1478, 8
        %v1497 = vpop.permute.xlu0 %1496
        %1498 = vrot.lane.b32.xlu0 %v1481, 8
        %v1499 = vpop.permute.xlu0 %1498
        %1500 = vrot.lane.b32.xlu0 %v1486, 8
        %v1501 = vpop.permute.xlu0 %1500
        %1502 = vrot.lane.b32.xlu0 %v1489, 8
        %v1503 = vpop.permute.xlu0 %1502
        %vm1508 = vcmask 130112
        %1509 = vst.msk [vmem:[#allocation2] sm:$0xff] %vm1508, %v1497
        %1510 = vst.msk [vmem:[#allocation2 + $0x8] sm:$0xff] %vm1508, %v1499
        %1511 = vst.msk [vmem:[#allocation2 + $0x10] sm:$0xff] %vm1508, %v1501
        %1512 = vst.msk [vmem:[#allocation2 + $0x18] sm:$0xff] %vm1508, %v1503
        %1513 = vrot.lane.b32.xlu0 %v1129, 112
        %v1514 = vpop.permute.xlu0 %1513
        %1515 = vrot.lane.b32.xlu0 %v1130, 112
        %v1516 = vpop.permute.xlu0 %1515
        %1517 = vrot.lane.b32.xlu0 %v1131, 112
        %v1518 = vpop.permute.xlu0 %1517
        %1519 = vrot.lane.b32.xlu0 %v1132, 112
        %v1520 = vpop.permute.xlu0 %1519
        %v1522 = vsel %vm1135, %v1514, 0
        %v1525 = vsel %vm1135, %v1516, 0
        %v1528 = vsel %vm1135, %v1518, 0
        %v1531 = vsel %vm1135, %v1520, 0
        %1533 = vmatprep.subr.bf16.mxu0 0
        %1534 = vmatpush1.bf16.xpose.msra.mxu0 0
        %1535 = vmatprep.subr.bf16.mxu0 0
        %1536 = vmatpush1.bf16.xpose.msra.mxu0 0
        %1537 = vmatprep.subr.bf16.mxu0 0
        %1538 = vmatpush1.bf16.xpose.msra.mxu0 0
        %1539 = vmatprep.subr.bf16.mxu0 0
        %1540 = vmatpush1.bf16.xpose.msra.mxu0 0
        %1541 = vmatprep.subr.bf16.mxu0 0
        %1542 = vmatpush1.bf16.xpose.msra.mxu0 0
        %1543 = vmatprep.subr.bf16.mxu0 0
        %1544 = vmatpush1.bf16.xpose.msra.mxu0 0
        %1545 = vmatprep.subr.bf16.mxu0 0
        %1546 = vmatpush1.bf16.xpose.msra.mxu0 %v1531
        %1547 = vmatprep.subr.bf16.mxu0 0
        %1548 = vmatpush1.bf16.xpose.msra.mxu0 %v1528
        %1549 = vmatprep.subr.bf16.mxu0 0
        %1550 = vmatpush2.bf16.xpose.msra.mxu0 0
        %1551 = vmatprep.subr.bf16.mxu0 0
        %1552 = vmatpush2.bf16.xpose.msra.mxu0 0
        %1553 = vmatprep.subr.bf16.mxu0 0
        %1554 = vmatpush2.bf16.xpose.msra.mxu0 0
        %1555 = vmatprep.subr.bf16.mxu0 0
        %1556 = vmatpush2.bf16.xpose.msra.mxu0 0
        %1557 = vmatprep.subr.bf16.mxu0 0
        %1558 = vmatpush2.bf16.xpose.msra.mxu0 0
        %1559 = vmatprep.subr.bf16.mxu0 0
        %1560 = vmatpush2.bf16.xpose.msra.mxu0 0
        %1561 = vmatprep.subr.bf16.mxu0 0
        %1562 = vmatpush2.bf16.xpose.msra.mxu0 0
        %1563 = vmatprep.subr.bf16.mxu0 0
        %1564 = vmatpush2.bf16.xpose.msra.mxu0 0
        %1565 = vmatprep.mubr.bf16.mxu0 0
        %1566 = vmatmul.mubr.bf16.gmra.mxu0 %v1522
        %v1567 = vpop.f32.mrf.mxu0
        %v1568 = vadd.f32 0.0, %v1567
        %v1569 = vpop.f32.mrf.mxu0
        %v1570 = vpop.f32.mrf.mxu0
        %v1571 = vadd.f32 0.0, %v1570
        %v1572 = vpop.f32.mrf.mxu0
        %1573 = vmatprep.mubr.bf16.mxu0 0
        %1574 = vmatmul.mubr.bf16.gmra.mxu0 %v1525
        %v1575 = vpop.f32.mrf.mxu0
        %v1576 = vadd.f32 0.0, %v1575
        %v1577 = vpop.f32.mrf.mxu0
        %v1578 = vpop.f32.mrf.mxu0
        %v1579 = vadd.f32 0.0, %v1578
        %v1580 = vpop.f32.mrf.mxu0
        %1581 = vdwg.mxu0
        %v1582 = vsel %vm798, -1e+09, %v1568
        %v1583 = vsel %vm799, -1e+09, %v1571
        %v1584 = vsel %vm800, -1e+09, %v1576
        %v1585 = vsel %vm801, -1e+09, %v1579
        %v1586 = vsel %vm831, %v1582, -inf
        %1587 = vmax.xlane.f32.xlu0 %v1586
        %v1588 = vpop.xlane.xlu0 %1587
        %v1589 = vsel %vm831, %v1583, -inf
        %1590 = vmax.xlane.f32.xlu0 %v1589
        %v1591 = vpop.xlane.xlu0 %1590
        %v1592 = vsel %vm831, %v1584, -inf
        %1593 = vmax.xlane.f32.xlu0 %v1592
        %v1594 = vpop.xlane.xlu0 %1593
        %v1595 = vsel %vm831, %v1585, -inf
        %1596 = vmax.xlane.f32.xlu0 %v1595
        %v1597 = vpop.xlane.xlu0 %1596
        %v1598 = vsub.f32 %v1582, %v1588
        %v1599 = vsub.f32 %v1583, %v1591
        %v1600 = vsub.f32 %v1584, %v1594
        %v1601 = vsub.f32 %v1585, %v1597
        %v1602 = vmul.f32 %v1598, 1.442695
        %v1603 = vpow.pop %v1602
        %v1604 = vmul.f32 %v1599, 1.442695
        %v1605 = vpow.pop %v1604
        %v1606 = vmul.f32 %v1600, 1.442695
        %v1607 = vpow.pop %v1606
        %v1608 = vmul.f32 %v1601, 1.442695
        %v1609 = vpow.pop %v1608
        %v1610 = vsel %vm831, %v1603, 0.0
        %1611 = vadd.xlane.f32.xlu0 %v1610
        %v1612 = vpop.xlane.xlu0 %1611
        %v1613 = vsel %vm831, %v1605, 0.0
        %1614 = vadd.xlane.f32.xlu0 %v1613
        %v1615 = vpop.xlane.xlu0 %1614
        %v1616 = vsel %vm831, %v1607, 0.0
        %1617 = vadd.xlane.f32.xlu0 %v1616
        %v1618 = vpop.xlane.xlu0 %1617
        %v1619 = vsel %vm831, %v1609, 0.0
        %1620 = vadd.xlane.f32.xlu0 %v1619
        %v1621 = vpop.xlane.xlu0 %1620
        %v1622 = vrcp.pop %v1612
        %v1623 = vrcp.pop %v1615
        %v1624 = vrcp.pop %v1618
        %v1625 = vrcp.pop %v1621
        %v1626 = vmul.f32 %v1603, %v1622
        %v1627 = vmul.f32 %v1605, %v1623
        %v1628 = vmul.f32 %v1607, %v1624
        %v1629 = vmul.f32 %v1609, %v1625
        %v1630 = vpack.c.bf16 %v1627, %v1626
        %v1631 = vpack.c.bf16 %v1629, %v1628
        %1632 = vrot.lane.b32.xlu0 %v1133, 112
        %v1633 = vpop.permute.xlu0 %1632
        %1634 = vrot.lane.b32.xlu0 %v1134, 112
        %v1635 = vpop.permute.xlu0 %1634
        %v1639 = vsel %vm831, %v1630, 0
        %v1642 = vsel %vm831, %v1631, 0
        %1644 = vmatprep.subr.bf16.mxu0 0
        %1645 = vmatpush1.bf16.msra.mxu0 0
        %1646 = vmatprep.subr.bf16.mxu0 0
        %1647 = vmatpush1.bf16.msra.mxu0 0
        %1648 = vmatprep.subr.bf16.mxu0 0
        %1649 = vmatpush1.bf16.msra.mxu0 0
        %1650 = vmatprep.subr.bf16.mxu0 0
        %1651 = vmatpush1.bf16.msra.mxu0 0
        %1652 = vmatprep.subr.bf16.mxu0 0
        %1653 = vmatpush1.bf16.msra.mxu0 0
        %1654 = vmatprep.subr.bf16.mxu0 0
        %1655 = vmatpush1.bf16.msra.mxu0 0
        %1656 = vmatprep.subr.bf16.mxu0 0
        %1657 = vmatpush1.bf16.msra.mxu0 %v1635
        %1658 = vmatprep.subr.bf16.mxu0 0
        %1659 = vmatpush1.bf16.msra.mxu0 %v1633
        %1660 = vmatprep.subr.bf16.mxu0 0
        %1661 = vmatpush2.bf16.msra.mxu0 0
        %1662 = vmatprep.subr.bf16.mxu0 0
        %1663 = vmatpush2.bf16.msra.mxu0 0
        %1664 = vmatprep.subr.bf16.mxu0 0
        %1665 = vmatpush2.bf16.msra.mxu0 0
        %1666 = vmatprep.subr.bf16.mxu0 0
        %1667 = vmatpush2.bf16.msra.mxu0 0
        %1668 = vmatprep.subr.bf16.mxu0 0
        %1669 = vmatpush2.bf16.msra.mxu0 0
        %1670 = vmatprep.subr.bf16.mxu0 0
        %1671 = vmatpush2.bf16.msra.mxu0 0
        %1672 = vmatprep.subr.bf16.mxu0 0
        %1673 = vmatpush2.bf16.msra.mxu0 0
        %1674 = vmatprep.subr.bf16.mxu0 0
        %1675 = vmatpush2.bf16.msra.mxu0 0
        %1676 = vmatprep.mubr.bf16.mxu0 0
        %1677 = vmatmul.mubr.bf16.gmra.mxu0 %v1639
        %v1678 = vpop.f32.mrf.mxu0
        %v1679 = vadd.f32 0.0, %v1678
        %v1680 = vpop.f32.mrf.mxu0
        %v1681 = vpop.f32.mrf.mxu0
        %v1682 = vadd.f32 0.0, %v1681
        %v1683 = vpop.f32.mrf.mxu0
        %1684 = vmatprep.mubr.bf16.mxu0 0
        %1685 = vmatmul.mubr.bf16.gmra.mxu0 %v1642
        %v1686 = vpop.f32.mrf.mxu0
        %v1687 = vadd.f32 0.0, %v1686
        %v1688 = vpop.f32.mrf.mxu0
        %v1689 = vpop.f32.mrf.mxu0
        %v1690 = vadd.f32 0.0, %v1689
        %v1691 = vpop.f32.mrf.mxu0
        %1692 = vdwg.mxu0
        %1697 = vrot.lane.b32.xlu0 %v1679, 16
        %v1698 = vpop.permute.xlu0 %1697
        %1699 = vrot.lane.b32.xlu0 %v1682, 16
        %v1700 = vpop.permute.xlu0 %1699
        %1701 = vrot.lane.b32.xlu0 %v1687, 16
        %v1702 = vpop.permute.xlu0 %1701
        %1703 = vrot.lane.b32.xlu0 %v1690, 16
        %v1704 = vpop.permute.xlu0 %1703
        %vm1709 = vcmask 195712
        %1710 = vst.msk [vmem:[#allocation2] sm:$0xff] %vm1709, %v1698
        %1711 = vst.msk [vmem:[#allocation2 + $0x8] sm:$0xff] %vm1709, %v1700
        %1712 = vst.msk [vmem:[#allocation2 + $0x10] sm:$0xff] %vm1709, %v1702
        %1713 = vst.msk [vmem:[#allocation2 + $0x18] sm:$0xff] %vm1709, %v1704
        %1714 = vrot.lane.b32.xlu0 %v1129, 104
        %v1715 = vpop.permute.xlu0 %1714
        %1716 = vrot.lane.b32.xlu0 %v1130, 104
        %v1717 = vpop.permute.xlu0 %1716
        %1718 = vrot.lane.b32.xlu0 %v1131, 104
        %v1719 = vpop.permute.xlu0 %1718
        %1720 = vrot.lane.b32.xlu0 %v1132, 104
        %v1721 = vpop.permute.xlu0 %1720
        %v1723 = vsel %vm1135, %v1715, 0
        %v1726 = vsel %vm1135, %v1717, 0
        %v1729 = vsel %vm1135, %v1719, 0
        %v1732 = vsel %vm1135, %v1721, 0
        %1734 = vmatprep.subr.bf16.mxu0 0
        %1735 = vmatpush1.bf16.xpose.msra.mxu0 0
        %1736 = vmatprep.subr.bf16.mxu0 0
        %1737 = vmatpush1.bf16.xpose.msra.mxu0 0
        %1738 = vmatprep.subr.bf16.mxu0 0
        %1739 = vmatpush1.bf16.xpose.msra.mxu0 0
        %1740 = vmatprep.subr.bf16.mxu0 0
        %1741 = vmatpush1.bf16.xpose.msra.mxu0 0
        %1742 = vmatprep.subr.bf16.mxu0 0
        %1743 = vmatpush1.bf16.xpose.msra.mxu0 0
        %1744 = vmatprep.subr.bf16.mxu0 0
        %1745 = vmatpush1.bf16.xpose.msra.mxu0 0
        %1746 = vmatprep.subr.bf16.mxu0 0
        %1747 = vmatpush1.bf16.xpose.msra.mxu0 %v1732
        %1748 = vmatprep.subr.bf16.mxu0 0
        %1749 = vmatpush1.bf16.xpose.msra.mxu0 %v1729
        %1750 = vmatprep.subr.bf16.mxu0 0
        %1751 = vmatpush2.bf16.xpose.msra.mxu0 0
        %1752 = vmatprep.subr.bf16.mxu0 0
        %1753 = vmatpush2.bf16.xpose.msra.mxu0 0
        %1754 = vmatprep.subr.bf16.mxu0 0
        %1755 = vmatpush2.bf16.xpose.msra.mxu0 0
        %1756 = vmatprep.subr.bf16.mxu0 0
        %1757 = vmatpush2.bf16.xpose.msra.mxu0 0
        %1758 = vmatprep.subr.bf16.mxu0 0
        %1759 = vmatpush2.bf16.xpose.msra.mxu0 0
        %1760 = vmatprep.subr.bf16.mxu0 0
        %1761 = vmatpush2.bf16.xpose.msra.mxu0 0
        %1762 = vmatprep.subr.bf16.mxu0 0
        %1763 = vmatpush2.bf16.xpose.msra.mxu0 0
        %1764 = vmatprep.subr.bf16.mxu0 0
        %1765 = vmatpush2.bf16.xpose.msra.mxu0 0
        %1766 = vmatprep.mubr.bf16.mxu0 0
        %1767 = vmatmul.mubr.bf16.gmra.mxu0 %v1723
        %v1768 = vpop.f32.mrf.mxu0
        %v1769 = vadd.f32 0.0, %v1768
        %v1770 = vpop.f32.mrf.mxu0
        %v1771 = vpop.f32.mrf.mxu0
        %v1772 = vadd.f32 0.0, %v1771
        %v1773 = vpop.f32.mrf.mxu0
        %1774 = vmatprep.mubr.bf16.mxu0 0
        %1775 = vmatmul.mubr.bf16.gmra.mxu0 %v1726
        %v1776 = vpop.f32.mrf.mxu0
        %v1777 = vadd.f32 0.0, %v1776
        %v1778 = vpop.f32.mrf.mxu0
        %v1779 = vpop.f32.mrf.mxu0
        %v1780 = vadd.f32 0.0, %v1779
        %v1781 = vpop.f32.mrf.mxu0
        %1782 = vdwg.mxu0
        %v1783 = vsel %vm798, -1e+09, %v1769
        %v1784 = vsel %vm799, -1e+09, %v1772
        %v1785 = vsel %vm800, -1e+09, %v1777
        %v1786 = vsel %vm801, -1e+09, %v1780
        %v1787 = vsel %vm831, %v1783, -inf
        %1788 = vmax.xlane.f32.xlu0 %v1787
        %v1789 = vpop.xlane.xlu0 %1788
        %v1790 = vsel %vm831, %v1784, -inf
        %1791 = vmax.xlane.f32.xlu0 %v1790
        %v1792 = vpop.xlane.xlu0 %1791
        %v1793 = vsel %vm831, %v1785, -inf
        %1794 = vmax.xlane.f32.xlu0 %v1793
        %v1795 = vpop.xlane.xlu0 %1794
        %v1796 = vsel %vm831, %v1786, -inf
        %1797 = vmax.xlane.f32.xlu0 %v1796
        %v1798 = vpop.xlane.xlu0 %1797
        %v1799 = vsub.f32 %v1783, %v1789
        %v1800 = vsub.f32 %v1784, %v1792
        %v1801 = vsub.f32 %v1785, %v1795
        %v1802 = vsub.f32 %v1786, %v1798
        %v1803 = vmul.f32 %v1799, 1.442695
        %v1804 = vpow.pop %v1803
        %v1805 = vmul.f32 %v1800, 1.442695
        %v1806 = vpow.pop %v1805
        %v1807 = vmul.f32 %v1801, 1.442695
        %v1808 = vpow.pop %v1807
        %v1809 = vmul.f32 %v1802, 1.442695
        %v1810 = vpow.pop %v1809
        %v1811 = vsel %vm831, %v1804, 0.0
        %1812 = vadd.xlane.f32.xlu0 %v1811
        %v1813 = vpop.xlane.xlu0 %1812
        %v1814 = vsel %vm831, %v1806, 0.0
        %1815 = vadd.xlane.f32.xlu0 %v1814
        %v1816 = vpop.xlane.xlu0 %1815
        %v1817 = vsel %vm831, %v1808, 0.0
        %1818 = vadd.xlane.f32.xlu0 %v1817
        %v1819 = vpop.xlane.xlu0 %1818
        %v1820 = vsel %vm831, %v1810, 0.0
        %1821 = vadd.xlane.f32.xlu0 %v1820
        %v1822 = vpop.xlane.xlu0 %1821
        %v1823 = vrcp.pop %v1813
        %v1824 = vrcp.pop %v1816
        %v1825 = vrcp.pop %v1819
        %v1826 = vrcp.pop %v1822
        %v1827 = vmul.f32 %v1804, %v1823
        %v1828 = vmul.f32 %v1806, %v1824
        %v1829 = vmul.f32 %v1808, %v1825
        %v1830 = vmul.f32 %v1810, %v1826
        %v1831 = vpack.c.bf16 %v1828, %v1827
        %v1832 = vpack.c.bf16 %v1830, %v1829
        %1833 = vrot.lane.b32.xlu0 %v1133, 104
        %v1834 = vpop.permute.xlu0 %1833
        %1835 = vrot.lane.b32.xlu0 %v1134, 104
        %v1836 = vpop.permute.xlu0 %1835
        %v1840 = vsel %vm831, %v1831, 0
        %v1843 = vsel %vm831, %v1832, 0
        %1845 = vmatprep.subr.bf16.mxu0 0
        %1846 = vmatpush1.bf16.msra.mxu0 0
        %1847 = vmatprep.subr.bf16.mxu0 0
        %1848 = vmatpush1.bf16.msra.mxu0 0
        %1849 = vmatprep.subr.bf16.mxu0 0
        %1850 = vmatpush1.bf16.msra.mxu0 0
        %1851 = vmatprep.subr.bf16.mxu0 0
        %1852 = vmatpush1.bf16.msra.mxu0 0
        %1853 = vmatprep.subr.bf16.mxu0 0
        %1854 = vmatpush1.bf16.msra.mxu0 0
        %1855 = vmatprep.subr.bf16.mxu0 0
        %1856 = vmatpush1.bf16.msra.mxu0 0
        %1857 = vmatprep.subr.bf16.mxu0 0
        %1858 = vmatpush1.bf16.msra.mxu0 %v1836
        %1859 = vmatprep.subr.bf16.mxu0 0
        %1860 = vmatpush1.bf16.msra.mxu0 %v1834
        %1861 = vmatprep.subr.bf16.mxu0 0
        %1862 = vmatpush2.bf16.msra.mxu0 0
        %1863 = vmatprep.subr.bf16.mxu0 0
        %1864 = vmatpush2.bf16.msra.mxu0 0
        %1865 = vmatprep.subr.bf16.mxu0 0
        %1866 = vmatpush2.bf16.msra.mxu0 0
        %1867 = vmatprep.subr.bf16.mxu0 0
        %1868 = vmatpush2.bf16.msra.mxu0 0
        %1869 = vmatprep.subr.bf16.mxu0 0
        %1870 = vmatpush2.bf16.msra.mxu0 0
        %1871 = vmatprep.subr.bf16.mxu0 0
        %1872 = vmatpush2.bf16.msra.mxu0 0
        %1873 = vmatprep.subr.bf16.mxu0 0
        %1874 = vmatpush2.bf16.msra.mxu0 0
        %1875 = vmatprep.subr.bf16.mxu0 0
        %1876 = vmatpush2.bf16.msra.mxu0 0
        %1877 = vmatprep.mubr.bf16.mxu0 0
        %1878 = vmatmul.mubr.bf16.gmra.mxu0 %v1840
        %v1879 = vpop.f32.mrf.mxu0
        %v1880 = vadd.f32 0.0, %v1879
        %v1881 = vpop.f32.mrf.mxu0
        %v1882 = vpop.f32.mrf.mxu0
        %v1883 = vadd.f32 0.0, %v1882
        %v1884 = vpop.f32.mrf.mxu0
        %1885 = vmatprep.mubr.bf16.mxu0 0
        %1886 = vmatmul.mubr.bf16.gmra.mxu0 %v1843
        %v1887 = vpop.f32.mrf.mxu0
        %v1888 = vadd.f32 0.0, %v1887
        %v1889 = vpop.f32.mrf.mxu0
        %v1890 = vpop.f32.mrf.mxu0
        %v1891 = vadd.f32 0.0, %v1890
        %v1892 = vpop.f32.mrf.mxu0
        %1893 = vdwg.mxu0
        %1898 = vrot.lane.b32.xlu0 %v1880, 24
        %v1899 = vpop.permute.xlu0 %1898
        %1900 = vrot.lane.b32.xlu0 %v1883, 24
        %v1901 = vpop.permute.xlu0 %1900
        %1902 = vrot.lane.b32.xlu0 %v1888, 24
        %v1903 = vpop.permute.xlu0 %1902
        %1904 = vrot.lane.b32.xlu0 %v1891, 24
        %v1905 = vpop.permute.xlu0 %1904
        %vm1910 = vcmask 261312
        %1911 = vst.msk [vmem:[#allocation2] sm:$0xff] %vm1910, %v1899
        %1912 = vst.msk [vmem:[#allocation2 + $0x8] sm:$0xff] %vm1910, %v1901
        %1913 = vst.msk [vmem:[#allocation2 + $0x10] sm:$0xff] %vm1910, %v1903
        %1914 = vst.msk [vmem:[#allocation2 + $0x18] sm:$0xff] %vm1910, %v1905
        %v1915 = vld [vmem:[#allocation2] sm:$0xff]
        %v1916 = vld [vmem:[#allocation2 + $0x8] sm:$0xff]
        %v1917 = vld [vmem:[#allocation2 + $0x10] sm:$0xff]
        %v1918 = vld [vmem:[#allocation2 + $0x18] sm:$0xff]
        %v1919 = vpack.c.bf16 %v1916, %v1915
        %v1920 = vpack.c.bf16 %v1918, %v1917
        %v1921 = vld [vmem:[#allocation18] sm:$0xf]
        %v1922 = vld [vmem:[#allocation18 + $0x4] sm:$0xf]
        %v1923 = vld [vmem:[#allocation18 + $0x8] sm:$0xf]
        %v1924 = vld [vmem:[#allocation18 + $0xc] sm:$0xf]
        %v1925 = vld [vmem:[#allocation20] sm:$0x1]
        %v1927 = vlaneseq
        %v1928 = vshrl.u32 %v1927, 7
        %v1929 = vsub.s32 0, %v1928
        %v1930 = vrot.slane %v1925, %v1929
        %v1936 = vunpack.c.l.b16 %v1921
        %v1937 = vunpack.c.l.b16 %v1922
        %v1938 = vunpack.c.l.b16 %v1923
        %v1939 = vunpack.c.l.b16 %v1924
        %v1940 = vpack.c.b16 %v1937, %v1936
        %v1941 = vpack.c.b16 %v1939, %v1938
        %v1945 = vsel %vm831, %v1919, 0
        %v1948 = vsel %vm831, %v1920, 0
        %1950 = vmatprep.subr.bf16.mxu0 0
        %1951 = vmatpush1.bf16.msra.mxu0 0
        %1952 = vmatprep.subr.bf16.mxu0 0
        %1953 = vmatpush1.bf16.msra.mxu0 0
        %1954 = vmatprep.subr.bf16.mxu0 0
        %1955 = vmatpush1.bf16.msra.mxu0 0
        %1956 = vmatprep.subr.bf16.mxu0 0
        %1957 = vmatpush1.bf16.msra.mxu0 0
        %1958 = vmatprep.subr.bf16.mxu0 0
        %1959 = vmatpush1.bf16.msra.mxu0 0
        %1960 = vmatprep.subr.bf16.mxu0 0
        %1961 = vmatpush1.bf16.msra.mxu0 0
        %1962 = vmatprep.subr.bf16.mxu0 0
        %1963 = vmatpush1.bf16.msra.mxu0 %v1941
        %1964 = vmatprep.subr.bf16.mxu0 0
        %1965 = vmatpush1.bf16.msra.mxu0 %v1940
        %1966 = vmatprep.subr.bf16.mxu0 0
        %1967 = vmatpush2.bf16.msra.mxu0 0
        %1968 = vmatprep.subr.bf16.mxu0 0
        %1969 = vmatpush2.bf16.msra.mxu0 0
        %1970 = vmatprep.subr.bf16.mxu0 0
        %1971 = vmatpush2.bf16.msra.mxu0 0
        %1972 = vmatprep.subr.bf16.mxu0 0
        %1973 = vmatpush2.bf16.msra.mxu0 0
        %1974 = vmatprep.subr.bf16.mxu0 0
        %1975 = vmatpush2.bf16.msra.mxu0 0
        %1976 = vmatprep.subr.bf16.mxu0 0
        %1977 = vmatpush2.bf16.msra.mxu0 0
        %1978 = vmatprep.subr.bf16.mxu0 0
        %1979 = vmatpush2.bf16.msra.mxu0 0
        %1980 = vmatprep.subr.bf16.mxu0 0
        %1981 = vmatpush2.bf16.msra.mxu0 0
        %1982 = vmatprep.mubr.bf16.mxu0 0
        %1983 = vmatmul.mubr.bf16.gmra.mxu0 %v1945
        %v1984 = vpop.f32.mrf.mxu0
        %v1985 = vadd.f32 %v1930, %v1984
        %v1986 = vpop.f32.mrf.mxu0
        %v1987 = vpop.f32.mrf.mxu0
        %v1988 = vadd.f32 %v1930, %v1987
        %v1989 = vpop.f32.mrf.mxu0
        %1990 = vmatprep.mubr.bf16.mxu0 0
        %1991 = vmatmul.mubr.bf16.gmra.mxu0 %v1948
        %v1992 = vpop.f32.mrf.mxu0
        %v1993 = vadd.f32 %v1930, %v1992
        %v1994 = vpop.f32.mrf.mxu0
        %v1995 = vpop.f32.mrf.mxu0
        %v1996 = vadd.f32 %v1930, %v1995
        %v1997 = vpop.f32.mrf.mxu0
        %1998 = vdwg.mxu0
        %v1999 = vadd.f32 %v1985, %v802
        %v2000 = vadd.f32 %v1988, %v803
        %v2001 = vadd.f32 %v1993, %v804
        %v2002 = vadd.f32 %v1996, %v805
        %v2003 = vsel %vm831, %v1999, 0.0
        %2004 = vadd.xlane.f32.xlu0 %v2003
        %v2005 = vpop.xlane.xlu0 %2004
        %v2006 = vsel %vm831, %v2000, 0.0
        %2007 = vadd.xlane.f32.xlu0 %v2006
        %v2008 = vpop.xlane.xlu0 %2007
        %v2009 = vsel %vm831, %v2001, 0.0
        %2010 = vadd.xlane.f32.xlu0 %v2009
        %v2011 = vpop.xlane.xlu0 %2010
        %v2012 = vsel %vm831, %v2002, 0.0
        %2013 = vadd.xlane.f32.xlu0 %v2012
        %v2014 = vpop.xlane.xlu0 %2013
        %v2015 = vrcp.pop 32.0
        %v2016 = vmul.f32 %v2005, %v2015
        %v2017 = vmul.f32 %v2008, %v2015
        %v2018 = vmul.f32 %v2011, %v2015
        %v2019 = vmul.f32 %v2014, %v2015
        %v2020 = vsub.f32 %v1999, %v2016
        %v2021 = vsub.f32 %v2000, %v2017
        %v2022 = vsub.f32 %v2001, %v2018
        %v2023 = vsub.f32 %v2002, %v2019
        %v2024 = vmul.f32 %v2020, %v2020
        %v2025 = vmul.f32 %v2021, %v2021
        %v2026 = vmul.f32 %v2022, %v2022
        %v2027 = vmul.f32 %v2023, %v2023
        %v2028 = vsel %vm831, %v2024, 0.0
        %2029 = vadd.xlane.f32.xlu0 %v2028
        %v2030 = vpop.xlane.xlu0 %2029
        %v2031 = vsel %vm831, %v2025, 0.0
        %2032 = vadd.xlane.f32.xlu0 %v2031
        %v2033 = vpop.xlane.xlu0 %2032
        %v2034 = vsel %vm831, %v2026, 0.0
        %2035 = vadd.xlane.f32.xlu0 %v2034
        %v2036 = vpop.xlane.xlu0 %2035
        %v2037 = vsel %vm831, %v2027, 0.0
        %2038 = vadd.xlane.f32.xlu0 %v2037
        %v2039 = vpop.xlane.xlu0 %2038
        %v2040 = vmul.f32 %v2030, %v2015
        %v2041 = vmul.f32 %v2033, %v2015
        %v2042 = vmul.f32 %v2036, %v2015
        %v2043 = vmul.f32 %v2039, %v2015
        %v2044 = vadd.f32 %v2040, 1e-05
        %v2045 = vadd.f32 %v2041, 1e-05
        %v2046 = vadd.f32 %v2042, 1e-05
        %v2047 = vadd.f32 %v2043, 1e-05
        %v2048 = vrsqrt.pop %v2044
        %v2049 = vrsqrt.pop %v2045
        %v2050 = vrsqrt.pop %v2046
        %v2051 = vrsqrt.pop %v2047
        %v2052 = vmul.f32 %v2020, %v2048
        %v2053 = vmul.f32 %v2021, %v2049
        %v2054 = vmul.f32 %v2022, %v2050
        %v2055 = vmul.f32 %v2023, %v2051
        %v2056 = vld [vmem:[#allocation21] sm:$0x1]
        %v2058 = vlaneseq
        %v2059 = vshrl.u32 %v2058, 7
        %v2060 = vsub.s32 0, %v2059
        %v2061 = vrot.slane %v2056, %v2060
        %v2063 = vmul.f32 %v2052, %v2061
        %v2064 = vmul.f32 %v2053, %v2061
        %v2065 = vmul.f32 %v2054, %v2061
        %v2066 = vmul.f32 %v2055, %v2061
        %v2067 = vld [vmem:[#allocation23] sm:$0x1]
        %v2069 = vlaneseq
        %v2070 = vshrl.u32 %v2069, 7
        %v2071 = vsub.s32 0, %v2070
        %v2072 = vrot.slane %v2067, %v2071
        %v2074 = vadd.f32 %v2063, %v2072
        %v2075 = vadd.f32 %v2064, %v2072
        %v2076 = vadd.f32 %v2065, %v2072
        %v2077 = vadd.f32 %v2066, %v2072
        %2078 = vst.msk [vmem:[%s789] sm:$0xff] %vm831, %v2074
        %2079 = vst.msk [vmem:[%s789 + $0x8] sm:$0xff] %vm831, %v2075
        %2080 = vst.msk [vmem:[%s789 + $0x10] sm:$0xff] %vm831, %v2076
        %2081 = vst.msk [vmem:[%s789 + $0x18] sm:$0xff] %vm831, %v2077
        %s2082 = sand.u32 %s427, 1
        %s2083 = scalar_lea.sflag [#allocation5], %s2082
        %s2084 = sand.u32 %s427, 1
        %s2085 = smul.addr %s2084, 32
        %s2086 = scalar_lea.vmem [#allocation24], %s2085
        // Predicated region
        $region141: #{mha_with_context.1} parent=87 // pred_check
          %p2087 = pneg %p437
        $region142: #{mha_with_context.1} parent=87 // pred_check_branch
          %2089 = sbr.rel (%p2087) target = $region144
        $region143: #{mha_with_context.1} parent=87 // pred_region
          %s2091 = ssub.s32 512, 512
          %2092 = vsyncadd %s2083, %s2091
          %s2093 = smul.addr %s42, 4
          %s2094 = smul.addr %s2093, 128
          %s2095 = scalar_lea.hbm %s17, %s2094
          %s2096 = sshll.u32 %s2086, 4
          %s2097 = int_to_ptr.vmem [resolvable:$true] %s2096
          %2102 = dma.vmem_to_hbm [thread:$0]  %s2097, 512, %s2095, %s2083, 128, 128, 8
        $region144: #{mha_with_context.1} parent=87 // pred_fallthru
          _
      $region88: #{mha_with_context.1} parent=5 // pred_fallthru
        _
      %p2103 = scmp.le.s32.totalorder 2, %s37
      // Predicated region
      $region145: #{mha_with_context.1} parent=5 // pred_check
        %p2104 = pneg %p2103
      $region146: #{mha_with_context.1} parent=5 // pred_check_branch
        %2106 = sbr.rel (%p2104) target = $region148
      $region147: #{mha_with_context.1} parent=5 // pred_region
        %s2107 = ssub.s32 %s37, 2
        // Predicated region
        $region149: #{mha_with_context.1} parent=147 // pred_check
          %p2108 = pneg %p443
        $region150: #{mha_with_context.1} parent=147 // pred_check_branch
          %2110 = sbr.rel (%p2108) target = $region152
        $region151: #{mha_with_context.1} parent=147 // pred_region
          %s2111 = sand.u32 %s428, 1
          %s2112 = scalar_lea.sflag [#allocation5], %s2111
          %s2113 = sand.u32 %s428, 1
          %s2114 = smul.addr %s2113, 32
          %s2115 = scalar_lea.vmem [#allocation24], %s2114
          %2116 = dma.done %s2112, 512
        $region152: #{mha_with_context.1} parent=147 // pred_fallthru
          _
      $region148: #{mha_with_context.1} parent=5 // pred_fallthru
        _
    $region6: #{mha_with_context.1} parent=1 // loop_footer
      %s41 = sadd.s32 1, %s37
    $region7: #{mha_with_context.1} parent=1 // loop_footer_branch
      %36 = sbr.rel target = $region3
    $region8: #{mha_with_context.1} parent=1 // loop_exit
      _
    %2117 = vsyncpa [#allocation4], 1
    %s2118 = scalar_lea.sflag [#allocation4], 1
    %2119 = vsyncpa %s2118, 1
    %2120 = vsyncpa [#allocation7], 1
    %s2121 = scalar_lea.sflag [#allocation7], 1
    %2122 = vsyncpa %s2121, 1
    %2123 = vsyncpa [#allocation10], 1
    %2124 = vsyncpa [#allocation13], 1
    %2125 = vsyncpa [#allocation16], 1
    %2126 = vsyncpa [#allocation19], 1
    %2127 = vsyncpa [#allocation22], 1
    %2128 = vsyncpa [#allocation5], 1
    %s2129 = scalar_lea.sflag [#allocation5], 1
    %2130 = vsyncpa %s2129, 1

</llo_original>
